<compile_context>
chip_gen: v7x
topology: tpu7x:2x2x1
jax: 0.10.0
libtpu: 0.0.40
codegen_flags: <defaults>
</compile_context>

<pallas_src>
import functools

import jax
import jax.numpy as jnp
from jax.experimental import pallas as pl
from jax.experimental.pallas import tpu as pltpu


def se_kernel(x_ref, w1t_ref, w2t_ref, o_ref):
    # x_ref: (Bt, S, C) block in native dtype, S = W*H.
    x = x_ref[...]

    # 1) squeeze: global average pool over spatial dims, accumulated in f32.
    pooled = jnp.mean(x.astype(jnp.float32), axis=1)                    # (Bt, C)

    # 2) excitation: Linear(C->C/r, no bias) -> ReLU -> Linear(C/r->C) -> Sigmoid.
    h = jnp.dot(pooled, w1t_ref[...], preferred_element_type=jnp.float32)
    h = jnp.maximum(h, 0.0)                                             # (Bt, hidden)
    gate = jax.nn.sigmoid(
        jnp.dot(h, w2t_ref[...], preferred_element_type=jnp.float32))   # (Bt, C)

    # 3) scale: per-channel gate broadcast over spatial, multiply in x's dtype.
    o_ref[...] = (x * gate.astype(x.dtype)[:, None, :]).astype(o_ref.dtype)


def _pick_block_batch(B, S, C, itemsize, budget_bytes, max_bt=16):
    """Largest divisor of B (<= max_bt) whose 2x-in + 2x-out pipeline fits."""
    best = 1
    for bt in range(1, min(B, max_bt) + 1):
        if B % bt:
            continue
        if 4 * bt * S * C * itemsize <= budget_bytes:
            best = bt
    return best


@functools.partial(jax.jit, static_argnames=("block_batch",))
def se_layer(x, w1, w2, block_batch=None):
    """x: (B, W, H, C) channel-last.
    w1: (C//r, C), w2: (C, C//r) -- PyTorch nn.Linear weight layout."""
    B, W, H, C = x.shape
    hidden = w1.shape[0]
    S = W * H

    # PyTorch Linear computes y = x @ W.T ; transpose once here, outside the kernel.
    w1t = jnp.asarray(w1).T.astype(jnp.float32)   # (C, hidden)
    w2t = jnp.asarray(w2).T.astype(jnp.float32)   # (hidden, C)

    if block_batch is None:
        block_batch = _pick_block_batch(B, S, C, x.dtype.itemsize,
                                        budget_bytes=24 << 20)
    assert B % block_batch == 0

    # Flatten spatial -> sublane dim; channels stay on lanes (lane-dense when
    # C is a multiple of 128).
    x3 = x.reshape(B, S, C)

    block_bytes = block_batch * S * C * x.dtype.itemsize
    vmem_limit = min(max(4 * block_bytes + (2 << 20), 32 << 20), 48 << 20)

    out3 = pl.pallas_call(
        se_kernel,
        out_shape=jax.ShapeDtypeStruct((B, S, C), x.dtype),
        grid_spec=pltpu.PrefetchScalarGridSpec(
            num_scalar_prefetch=0,
            grid=(B // block_batch,),
            in_specs=[
                pl.BlockSpec((block_batch, S, C), lambda b: (b, 0, 0)),
                pl.BlockSpec((C, hidden), lambda b: (0, 0)),
                pl.BlockSpec((hidden, C), lambda b: (0, 0)),
            ],
            out_specs=pl.BlockSpec((block_batch, S, C), lambda b: (b, 0, 0)),
        ),
        compiler_params=pltpu.CompilerParams(
            dimension_semantics=("parallel",),
            vmem_limit_bytes=vmem_limit,
        ),
    )(x3, w1t, w2t)

    return out3.reshape(B, W, H, C)


def se_layer_ref(x, w1, w2):
    # Pure-JAX reference for correctness checking.
    xf = x.astype(jnp.float32)
    pooled = jnp.mean(xf, axis=(1, 2))                 # (B, C)
    h = jnp.maximum(pooled @ w1.T, 0.0)                # (B, C//r)
    s = jax.nn.sigmoid(h @ w2.T)                       # (B, C)
    return (xf * s[:, None, None, :]).astype(x.dtype)


if __name__ == "__main__":
    B, W, H, C = 8, 16, 16, 128
    reduction = 16
    hidden = C // reduction  # 8

    key = jax.random.PRNGKey(0)
    kx, k1, k2 = jax.random.split(key, 3)

    x = jax.random.normal(kx, (B, W, H, C), dtype=jnp.float32)
    # Deterministic synthetic weights (PyTorch Linear weight shape: (out, in)).
    w1 = jax.random.normal(k1, (hidden, C), dtype=jnp.float32) * (1.0 / jnp.sqrt(C))
    w2 = jax.random.normal(k2, (C, hidden), dtype=jnp.float32) * (1.0 / jnp.sqrt(hidden))

    ref = se_layer_ref(x, w1, w2)

    # Default block_batch (the whole small batch fits in one block).
    out = jax.block_until_ready(se_layer(x, w1, w2))
    assert out.shape == (B, W, H, C)
    assert jnp.allclose(out, ref, atol=1e-5, rtol=1e-5)

    # Forced smaller block_batch to exercise multi-step grid pipelining.
    out2 = jax.block_until_ready(se_layer(x, w1, w2, block_batch=2))
    assert jnp.allclose(out2, ref, atol=1e-5, rtol=1e-5)

    print("KERNEL_OK")
</pallas_src>

<mosaic_0001>
module attributes {stable_mosaic.version = 11 : i64} {
  func.func @se_kernel(%arg0: i32, %arg1: memref<8x256x128xf32, #tpu.memory_space<vmem>>, %arg2: memref<128x8xf32, #tpu.memory_space<vmem>>, %arg3: memref<8x128xf32, #tpu.memory_space<vmem>>, %arg4: memref<8x256x128xf32, #tpu.memory_space<vmem>>) attributes {dimension_semantics = [#tpu.dimension_semantics<parallel>], iteration_bounds = array<i64: 1>, scalar_prefetch = 0 : i64, scratch_operands = 0 : i64, tpu.core_type = #tpu.core_type<tc>, window_params = [{transform_indices = @transform_0, window_bounds = array<i64: 8, 256, 128>}, {pipeline_mode = #tpu.pipeline_mode<synchronous>, transform_indices = @transform_1, window_bounds = array<i64: 128, 8>}, {pipeline_mode = #tpu.pipeline_mode<synchronous>, transform_indices = @transform_2, window_bounds = array<i64: 8, 128>}, {transform_indices = @transform_3, window_bounds = array<i64: 8, 256, 128>}]} {
    %c0 = arith.constant 0 : index
    %c0_0 = arith.constant 0 : index
    %c0_1 = arith.constant 0 : index
    %0 = vector.load %arg1[%c0, %c0_0, %c0_1] : memref<8x256x128xf32, #tpu.memory_space<vmem>>, vector<8x256x128xf32>
    %cst = arith.constant dense<0.000000e+00> : vector<8x128xf32>
    %1 = vector.multi_reduction <add>, %0, %cst [1] : vector<8x256x128xf32> to vector<8x128xf32>
    %cst_2 = arith.constant 2.560000e+02 : f32
    %2 = vector.broadcast %cst_2 : f32 to vector<8x128xf32>
    %3 = arith.divf %1, %2 : vector<8x128xf32>
    %c0_3 = arith.constant 0 : index
    %c0_4 = arith.constant 0 : index
    %4 = vector.load %arg2[%c0_3, %c0_4] : memref<128x8xf32, #tpu.memory_space<vmem>>, vector<128x8xf32>
    %cst_5 = arith.constant dense<0.000000e+00> : vector<8x8xf32>
    %5 = tpu.matmul %3, %4, %cst_5 {dimension_numbers = #tpu.dot_dimension_numbers<[1], [0], [0], [1], [0, 0, 1, 1], [], []>} : vector<8x128xf32>, vector<128x8xf32>, vector<8x8xf32> -> vector<8x8xf32>
    %cst_6 = arith.constant 0.000000e+00 : f32
    %6 = vector.broadcast %cst_6 : f32 to vector<8x8xf32>
    %7 = arith.maximumf %5, %6 : vector<8x8xf32>
    %c0_7 = arith.constant 0 : index
    %c0_8 = arith.constant 0 : index
    %8 = vector.load %arg3[%c0_7, %c0_8] : memref<8x128xf32, #tpu.memory_space<vmem>>, vector<8x128xf32>
    %cst_9 = arith.constant dense<0.000000e+00> : vector<8x128xf32>
    %9 = tpu.matmul %7, %8, %cst_9 {dimension_numbers = #tpu.dot_dimension_numbers<[1], [0], [0], [1], [0, 0, 1, 1], [], []>} : vector<8x8xf32>, vector<8x128xf32>, vector<8x128xf32> -> vector<8x128xf32>
    %10 = arith.negf %9 : vector<8x128xf32>
    %11 = math.exp %10 : vector<8x128xf32>
    %cst_10 = arith.constant 1.000000e+00 : f32
    %12 = vector.broadcast %cst_10 : f32 to vector<8x128xf32>
    %13 = arith.addf %12, %11 : vector<8x128xf32>
    %14 = arith.divf %12, %13 : vector<8x128xf32>
    %15 = vector.shape_cast %14 : vector<8x128xf32> to vector<8x1x128xf32>
    %16 = vector.broadcast %15 : vector<8x1x128xf32> to vector<8x256x128xf32>
    %17 = arith.mulf %0, %16 : vector<8x256x128xf32>
    %c0_11 = arith.constant 0 : index
    %c0_12 = arith.constant 0 : index
    %c0_13 = arith.constant 0 : index
    %18 = vector.load %arg4[%c0_11, %c0_12, %c0_13] : memref<8x256x128xf32, #tpu.memory_space<vmem>>, vector<8x256x128xf32>
    tpu.vector_store %arg4[%c0_11, %c0_12, %c0_13], %17 {strides = array<i32>} : memref<8x256x128xf32, #tpu.memory_space<vmem>>, vector<8x256x128xf32>,
    return
  }
  func.func @transform_0(%arg0: i32) -> (i32, i32, i32) {
    %c0_i32 = arith.constant 0 : i32
    %c0_i32_0 = arith.constant 0 : i32
    %c0_i32_1 = arith.constant 0 : i32
    return %arg0, %c0_i32, %c0_i32_0 : i32, i32, i32
  }
  func.func @transform_1(%arg0: i32) -> (i32, i32) {
    %c0_i32 = arith.constant 0 : i32
    %c0_i32_0 = arith.constant 0 : i32
    %c0_i32_1 = arith.constant 0 : i32
    return %c0_i32, %c0_i32_0 : i32, i32
  }
  func.func @transform_2(%arg0: i32) -> (i32, i32) {
    %c0_i32 = arith.constant 0 : i32
    %c0_i32_0 = arith.constant 0 : i32
    %c0_i32_1 = arith.constant 0 : i32
    return %c0_i32, %c0_i32_0 : i32, i32
  }
  func.func @transform_3(%arg0: i32) -> (i32, i32, i32) {
    %c0_i32 = arith.constant 0 : i32
    %c0_i32_0 = arith.constant 0 : i32
    %c0_i32_1 = arith.constant 0 : i32
    return %arg0, %c0_i32, %c0_i32_0 : i32, i32, i32
  }
}

</mosaic_0001>

<llo_original>
// kernel: se_layer.1
$region0: #{se_layer.1}
  #allocation0 [shape = 'u32[]', space=smem, size = 0x4, offset = 0x4, fixed_abs, tag = 'smem constant byte address 0x4 - core index']
  #allocation1 [shape = 'u32[144,128]{1,0:T(1,128)}', space=vmem, size = 0x12000, scoped, tag = 'internal scratch']
  %s0 = inlined_call_operand.hbm [shape: f32[8,256,128], index: 0, kind: input, shape index: {}]
  %s1 = inlined_call_operand.vmem [shape: f32[128,8], index: 1, kind: input, shape index: {}]
  %s2 = inlined_call_operand.vmem [shape: f32[8,128], index: 2, kind: input, shape index: {}]
  %s3 = inlined_call_operand.hbm [shape: f32[8,256,128], index: 3, kind: output, shape index: {}]
  %s4 = sld [smem:[#allocation0]]
  $region26: #{se_layer.1} parent=0
    _
  %s6 = ssub.s32 1, %s4
  %s7 = scalar_select 0, %s6, %s4
  $region1: #{se_layer.1} parent=0
    #allocation2 [shape = 'u8[1048576]{0}', space=vmem, size = 0x100000, scoped, tag = 'input window, operand 0, single buffered']
    #allocation3 [shape = 's32[1]{0}', space=sflag, size = 0x4, scoped, tag = 'scoped memory for se_layer.1']
    #allocation4 [shape = 's32[1]{0}', space=sflag, size = 0x4, scoped, tag = 'scoped memory for se_layer.1']
    #allocation5 [shape = 'u8[1048576]{0}', space=vmem, size = 0x100000, scoped, tag = 'output window, operand 0, single buffered']
    %8 = vsyncpa [#allocation3], 0
    %9 = vsyncpa [#allocation4], 0
    // Predicated region
    $region2: #{se_layer.1} parent=1 // pred_check
      _
    $region3: #{se_layer.1} parent=1 // pred_check_branch
      %11 = sbr.rel (0) target = $region5
    $region4: #{se_layer.1} parent=1 // pred_region
      %s13 = ssub.s32 32768, 32768
      %14 = vsyncadd [#allocation3], %s13
      %s15 = sshll.u32 [#allocation2], 4
      %s16 = int_to_ptr.vmem [resolvable:$true] %s15
      %21 = dma.hbm_to_vmem [thread:$0]  %s0, 32768, %s16, [#allocation3], 128, 128, 8
    $region5: #{se_layer.1} parent=1 // pred_fallthru
      _
    // Predicated region
    $region6: #{se_layer.1} parent=1 // pred_check
      _
    $region7: #{se_layer.1} parent=1 // pred_check_branch
      %23 = sbr.rel (0) target = $region9
    $region8: #{se_layer.1} parent=1 // pred_region
      _
    $region9: #{se_layer.1} parent=1 // pred_fallthru
      _
    // Predicated region
    $region10: #{se_layer.1} parent=1 // pred_check
      _
    $region11: #{se_layer.1} parent=1 // pred_check_branch
      %25 = sbr.rel (0) target = $region13
    $region12: #{se_layer.1} parent=1 // pred_region
      _
    $region13: #{se_layer.1} parent=1 // pred_fallthru
      _
    // Predicated region
    $region14: #{se_layer.1} parent=1 // pred_check
      _
    $region15: #{se_layer.1} parent=1 // pred_check_branch
      %27 = sbr.rel (0) target = $region17
    $region16: #{se_layer.1} parent=1 // pred_region
      %28 = dma.done [#allocation3], 32768
    $region17: #{se_layer.1} parent=1 // pred_fallthru
      _
    %v29 = vld [vmem:[#allocation2] sm:$0xff]
    %v30 = vld [vmem:[#allocation2 + $0x8] sm:$0xff]
    %v31 = vld [vmem:[#allocation2 + $0x10] sm:$0xff]
    %v32 = vld [vmem:[#allocation2 + $0x18] sm:$0xff]
    %v33 = vld [vmem:[#allocation2 + $0x20] sm:$0xff]
    %v34 = vld [vmem:[#allocation2 + $0x28] sm:$0xff]
    %v35 = vld [vmem:[#allocation2 + $0x30] sm:$0xff]
    %v36 = vld [vmem:[#allocation2 + $0x38] sm:$0xff]
    %v37 = vld [vmem:[#allocation2 + $0x40] sm:$0xff]
    %v38 = vld [vmem:[#allocation2 + $0x48] sm:$0xff]
    %v39 = vld [vmem:[#allocation2 + $0x50] sm:$0xff]
    %v40 = vld [vmem:[#allocation2 + $0x58] sm:$0xff]
    %v41 = vld [vmem:[#allocation2 + $0x60] sm:$0xff]
    %v42 = vld [vmem:[#allocation2 + $0x68] sm:$0xff]
    %v43 = vld [vmem:[#allocation2 + $0x70] sm:$0xff]
    %v44 = vld [vmem:[#allocation2 + $0x78] sm:$0xff]
    %v45 = vld [vmem:[#allocation2 + $0x80] sm:$0xff]
    %v46 = vld [vmem:[#allocation2 + $0x88] sm:$0xff]
    %v47 = vld [vmem:[#allocation2 + $0x90] sm:$0xff]
    %v48 = vld [vmem:[#allocation2 + $0x98] sm:$0xff]
    %v49 = vld [vmem:[#allocation2 + $0xa0] sm:$0xff]
    %v50 = vld [vmem:[#allocation2 + $0xa8] sm:$0xff]
    %v51 = vld [vmem:[#allocation2 + $0xb0] sm:$0xff]
    %v52 = vld [vmem:[#allocation2 + $0xb8] sm:$0xff]
    %v53 = vld [vmem:[#allocation2 + $0xc0] sm:$0xff]
    %v54 = vld [vmem:[#allocation2 + $0xc8] sm:$0xff]
    %v55 = vld [vmem:[#allocation2 + $0xd0] sm:$0xff]
    %v56 = vld [vmem:[#allocation2 + $0xd8] sm:$0xff]
    %v57 = vld [vmem:[#allocation2 + $0xe0] sm:$0xff]
    %v58 = vld [vmem:[#allocation2 + $0xe8] sm:$0xff]
    %v59 = vld [vmem:[#allocation2 + $0xf0] sm:$0xff]
    %v60 = vld [vmem:[#allocation2 + $0xf8] sm:$0xff]
    %v61 = vld [vmem:[#allocation2 + $0x100] sm:$0xff]
    %v62 = vld [vmem:[#allocation2 + $0x108] sm:$0xff]
    %v63 = vld [vmem:[#allocation2 + $0x110] sm:$0xff]
    %v64 = vld [vmem:[#allocation2 + $0x118] sm:$0xff]
    %v65 = vld [vmem:[#allocation2 + $0x120] sm:$0xff]
    %v66 = vld [vmem:[#allocation2 + $0x128] sm:$0xff]
    %v67 = vld [vmem:[#allocation2 + $0x130] sm:$0xff]
    %v68 = vld [vmem:[#allocation2 + $0x138] sm:$0xff]
    %v69 = vld [vmem:[#allocation2 + $0x140] sm:$0xff]
    %v70 = vld [vmem:[#allocation2 + $0x148] sm:$0xff]
    %v71 = vld [vmem:[#allocation2 + $0x150] sm:$0xff]
    %v72 = vld [vmem:[#allocation2 + $0x158] sm:$0xff]
    %v73 = vld [vmem:[#allocation2 + $0x160] sm:$0xff]
    %v74 = vld [vmem:[#allocation2 + $0x168] sm:$0xff]
    %v75 = vld [vmem:[#allocation2 + $0x170] sm:$0xff]
    %v76 = vld [vmem:[#allocation2 + $0x178] sm:$0xff]
    %v77 = vld [vmem:[#allocation2 + $0x180] sm:$0xff]
    %v78 = vld [vmem:[#allocation2 + $0x188] sm:$0xff]
    %v79 = vld [vmem:[#allocation2 + $0x190] sm:$0xff]
    %v80 = vld [vmem:[#allocation2 + $0x198] sm:$0xff]
    %v81 = vld [vmem:[#allocation2 + $0x1a0] sm:$0xff]
    %v82 = vld [vmem:[#allocation2 + $0x1a8] sm:$0xff]
    %v83 = vld [vmem:[#allocation2 + $0x1b0] sm:$0xff]
    %v84 = vld [vmem:[#allocation2 + $0x1b8] sm:$0xff]
    %v85 = vld [vmem:[#allocation2 + $0x1c0] sm:$0xff]
    %v86 = vld [vmem:[#allocation2 + $0x1c8] sm:$0xff]
    %v87 = vld [vmem:[#allocation2 + $0x1d0] sm:$0xff]
    %v88 = vld [vmem:[#allocation2 + $0x1d8] sm:$0xff]
    %v89 = vld [vmem:[#allocation2 + $0x1e0] sm:$0xff]
    %v90 = vld [vmem:[#allocation2 + $0x1e8] sm:$0xff]
    %v91 = vld [vmem:[#allocation2 + $0x1f0] sm:$0xff]
    %v92 = vld [vmem:[#allocation2 + $0x1f8] sm:$0xff]
    %v93 = vld [vmem:[#allocation2 + $0x200] sm:$0xff]
    %v94 = vld [vmem:[#allocation2 + $0x208] sm:$0xff]
    %v95 = vld [vmem:[#allocation2 + $0x210] sm:$0xff]
    %v96 = vld [vmem:[#allocation2 + $0x218] sm:$0xff]
    %v97 = vld [vmem:[#allocation2 + $0x220] sm:$0xff]
    %v98 = vld [vmem:[#allocation2 + $0x228] sm:$0xff]
    %v99 = vld [vmem:[#allocation2 + $0x230] sm:$0xff]
    %v100 = vld [vmem:[#allocation2 + $0x238] sm:$0xff]
    %v101 = vld [vmem:[#allocation2 + $0x240] sm:$0xff]
    %v102 = vld [vmem:[#allocation2 + $0x248] sm:$0xff]
    %v103 = vld [vmem:[#allocation2 + $0x250] sm:$0xff]
    %v104 = vld [vmem:[#allocation2 + $0x258] sm:$0xff]
    %v105 = vld [vmem:[#allocation2 + $0x260] sm:$0xff]
    %v106 = vld [vmem:[#allocation2 + $0x268] sm:$0xff]
    %v107 = vld [vmem:[#allocation2 + $0x270] sm:$0xff]
    %v108 = vld [vmem:[#allocation2 + $0x278] sm:$0xff]
    %v109 = vld [vmem:[#allocation2 + $0x280] sm:$0xff]
    %v110 = vld [vmem:[#allocation2 + $0x288] sm:$0xff]
    %v111 = vld [vmem:[#allocation2 + $0x290] sm:$0xff]
    %v112 = vld [vmem:[#allocation2 + $0x298] sm:$0xff]
    %v113 = vld [vmem:[#allocation2 + $0x2a0] sm:$0xff]
    %v114 = vld [vmem:[#allocation2 + $0x2a8] sm:$0xff]
    %v115 = vld [vmem:[#allocation2 + $0x2b0] sm:$0xff]
    %v116 = vld [vmem:[#allocation2 + $0x2b8] sm:$0xff]
    %v117 = vld [vmem:[#allocation2 + $0x2c0] sm:$0xff]
    %v118 = vld [vmem:[#allocation2 + $0x2c8] sm:$0xff]
    %v119 = vld [vmem:[#allocation2 + $0x2d0] sm:$0xff]
    %v120 = vld [vmem:[#allocation2 + $0x2d8] sm:$0xff]
    %v121 = vld [vmem:[#allocation2 + $0x2e0] sm:$0xff]
    %v122 = vld [vmem:[#allocation2 + $0x2e8] sm:$0xff]
    %v123 = vld [vmem:[#allocation2 + $0x2f0] sm:$0xff]
    %v124 = vld [vmem:[#allocation2 + $0x2f8] sm:$0xff]
    %v125 = vld [vmem:[#allocation2 + $0x300] sm:$0xff]
    %v126 = vld [vmem:[#allocation2 + $0x308] sm:$0xff]
    %v127 = vld [vmem:[#allocation2 + $0x310] sm:$0xff]
    %v128 = vld [vmem:[#allocation2 + $0x318] sm:$0xff]
    %v129 = vld [vmem:[#allocation2 + $0x320] sm:$0xff]
    %v130 = vld [vmem:[#allocation2 + $0x328] sm:$0xff]
    %v131 = vld [vmem:[#allocation2 + $0x330] sm:$0xff]
    %v132 = vld [vmem:[#allocation2 + $0x338] sm:$0xff]
    %v133 = vld [vmem:[#allocation2 + $0x340] sm:$0xff]
    %v134 = vld [vmem:[#allocation2 + $0x348] sm:$0xff]
    %v135 = vld [vmem:[#allocation2 + $0x350] sm:$0xff]
    %v136 = vld [vmem:[#allocation2 + $0x358] sm:$0xff]
    %v137 = vld [vmem:[#allocation2 + $0x360] sm:$0xff]
    %v138 = vld [vmem:[#allocation2 + $0x368] sm:$0xff]
    %v139 = vld [vmem:[#allocation2 + $0x370] sm:$0xff]
    %v140 = vld [vmem:[#allocation2 + $0x378] sm:$0xff]
    %v141 = vld [vmem:[#allocation2 + $0x380] sm:$0xff]
    %v142 = vld [vmem:[#allocation2 + $0x388] sm:$0xff]
    %v143 = vld [vmem:[#allocation2 + $0x390] sm:$0xff]
    %v144 = vld [vmem:[#allocation2 + $0x398] sm:$0xff]
    %v145 = vld [vmem:[#allocation2 + $0x3a0] sm:$0xff]
    %v146 = vld [vmem:[#allocation2 + $0x3a8] sm:$0xff]
    %v147 = vld [vmem:[#allocation2 + $0x3b0] sm:$0xff]
    %v148 = vld [vmem:[#allocation2 + $0x3b8] sm:$0xff]
    %v149 = vld [vmem:[#allocation2 + $0x3c0] sm:$0xff]
    %v150 = vld [vmem:[#allocation2 + $0x3c8] sm:$0xff]
    %v151 = vld [vmem:[#allocation2 + $0x3d0] sm:$0xff]
    %v152 = vld [vmem:[#allocation2 + $0x3d8] sm:$0xff]
    %v153 = vld [vmem:[#allocation2 + $0x3e0] sm:$0xff]
    %v154 = vld [vmem:[#allocation2 + $0x3e8] sm:$0xff]
    %v155 = vld [vmem:[#allocation2 + $0x3f0] sm:$0xff]
    %v156 = vld [vmem:[#allocation2 + $0x3f8] sm:$0xff]
    %v157 = vld [vmem:[#allocation2 + $0x400] sm:$0xff]
    %v158 = vld [vmem:[#allocation2 + $0x408] sm:$0xff]
    %v159 = vld [vmem:[#allocation2 + $0x410] sm:$0xff]
    %v160 = vld [vmem:[#allocation2 + $0x418] sm:$0xff]
    %v161 = vld [vmem:[#allocation2 + $0x420] sm:$0xff]
    %v162 = vld [vmem:[#allocation2 + $0x428] sm:$0xff]
    %v163 = vld [vmem:[#allocation2 + $0x430] sm:$0xff]
    %v164 = vld [vmem:[#allocation2 + $0x438] sm:$0xff]
    %v165 = vld [vmem:[#allocation2 + $0x440] sm:$0xff]
    %v166 = vld [vmem:[#allocation2 + $0x448] sm:$0xff]
    %v167 = vld [vmem:[#allocation2 + $0x450] sm:$0xff]
    %v168 = vld [vmem:[#allocation2 + $0x458] sm:$0xff]
    %v169 = vld [vmem:[#allocation2 + $0x460] sm:$0xff]
    %v170 = vld [vmem:[#allocation2 + $0x468] sm:$0xff]
    %v171 = vld [vmem:[#allocation2 + $0x470] sm:$0xff]
    %v172 = vld [vmem:[#allocation2 + $0x478] sm:$0xff]
    %v173 = vld [vmem:[#allocation2 + $0x480] sm:$0xff]
    %v174 = vld [vmem:[#allocation2 + $0x488] sm:$0xff]
    %v175 = vld [vmem:[#allocation2 + $0x490] sm:$0xff]
    %v176 = vld [vmem:[#allocation2 + $0x498] sm:$0xff]
    %v177 = vld [vmem:[#allocation2 + $0x4a0] sm:$0xff]
    %v178 = vld [vmem:[#allocation2 + $0x4a8] sm:$0xff]
    %v179 = vld [vmem:[#allocation2 + $0x4b0] sm:$0xff]
    %v180 = vld [vmem:[#allocation2 + $0x4b8] sm:$0xff]
    %v181 = vld [vmem:[#allocation2 + $0x4c0] sm:$0xff]
    %v182 = vld [vmem:[#allocation2 + $0x4c8] sm:$0xff]
    %v183 = vld [vmem:[#allocation2 + $0x4d0] sm:$0xff]
    %v184 = vld [vmem:[#allocation2 + $0x4d8] sm:$0xff]
    %v185 = vld [vmem:[#allocation2 + $0x4e0] sm:$0xff]
    %v186 = vld [vmem:[#allocation2 + $0x4e8] sm:$0xff]
    %v187 = vld [vmem:[#allocation2 + $0x4f0] sm:$0xff]
    %v188 = vld [vmem:[#allocation2 + $0x4f8] sm:$0xff]
    %v189 = vld [vmem:[#allocation2 + $0x500] sm:$0xff]
    %v190 = vld [vmem:[#allocation2 + $0x508] sm:$0xff]
    %v191 = vld [vmem:[#allocation2 + $0x510] sm:$0xff]
    %v192 = vld [vmem:[#allocation2 + $0x518] sm:$0xff]
    %v193 = vld [vmem:[#allocation2 + $0x520] sm:$0xff]
    %v194 = vld [vmem:[#allocation2 + $0x528] sm:$0xff]
    %v195 = vld [vmem:[#allocation2 + $0x530] sm:$0xff]
    %v196 = vld [vmem:[#allocation2 + $0x538] sm:$0xff]
    %v197 = vld [vmem:[#allocation2 + $0x540] sm:$0xff]
    %v198 = vld [vmem:[#allocation2 + $0x548] sm:$0xff]
    %v199 = vld [vmem:[#allocation2 + $0x550] sm:$0xff]
    %v200 = vld [vmem:[#allocation2 + $0x558] sm:$0xff]
    %v201 = vld [vmem:[#allocation2 + $0x560] sm:$0xff]
    %v202 = vld [vmem:[#allocation2 + $0x568] sm:$0xff]
    %v203 = vld [vmem:[#allocation2 + $0x570] sm:$0xff]
    %v204 = vld [vmem:[#allocation2 + $0x578] sm:$0xff]
    %v205 = vld [vmem:[#allocation2 + $0x580] sm:$0xff]
    %v206 = vld [vmem:[#allocation2 + $0x588] sm:$0xff]
    %v207 = vld [vmem:[#allocation2 + $0x590] sm:$0xff]
    %v208 = vld [vmem:[#allocation2 + $0x598] sm:$0xff]
    %v209 = vld [vmem:[#allocation2 + $0x5a0] sm:$0xff]
    %v210 = vld [vmem:[#allocation2 + $0x5a8] sm:$0xff]
    %v211 = vld [vmem:[#allocation2 + $0x5b0] sm:$0xff]
    %v212 = vld [vmem:[#allocation2 + $0x5b8] sm:$0xff]
    %v213 = vld [vmem:[#allocation2 + $0x5c0] sm:$0xff]
    %v214 = vld [vmem:[#allocation2 + $0x5c8] sm:$0xff]
    %v215 = vld [vmem:[#allocation2 + $0x5d0] sm:$0xff]
    %v216 = vld [vmem:[#allocation2 + $0x5d8] sm:$0xff]
    %v217 = vld [vmem:[#allocation2 + $0x5e0] sm:$0xff]
    %v218 = vld [vmem:[#allocation2 + $0x5e8] sm:$0xff]
    %v219 = vld [vmem:[#allocation2 + $0x5f0] sm:$0xff]
    %v220 = vld [vmem:[#allocation2 + $0x5f8] sm:$0xff]
    %v221 = vld [vmem:[#allocation2 + $0x600] sm:$0xff]
    %v222 = vld [vmem:[#allocation2 + $0x608] sm:$0xff]
    %v223 = vld [vmem:[#allocation2 + $0x610] sm:$0xff]
    %v224 = vld [vmem:[#allocation2 + $0x618] sm:$0xff]
    %v225 = vld [vmem:[#allocation2 + $0x620] sm:$0xff]
    %v226 = vld [vmem:[#allocation2 + $0x628] sm:$0xff]
    %v227 = vld [vmem:[#allocation2 + $0x630] sm:$0xff]
    %v228 = vld [vmem:[#allocation2 + $0x638] sm:$0xff]
    %v229 = vld [vmem:[#allocation2 + $0x640] sm:$0xff]
    %v230 = vld [vmem:[#allocation2 + $0x648] sm:$0xff]
    %v231 = vld [vmem:[#allocation2 + $0x650] sm:$0xff]
    %v232 = vld [vmem:[#allocation2 + $0x658] sm:$0xff]
    %v233 = vld [vmem:[#allocation2 + $0x660] sm:$0xff]
    %v234 = vld [vmem:[#allocation2 + $0x668] sm:$0xff]
    %v235 = vld [vmem:[#allocation2 + $0x670] sm:$0xff]
    %v236 = vld [vmem:[#allocation2 + $0x678] sm:$0xff]
    %v237 = vld [vmem:[#allocation2 + $0x680] sm:$0xff]
    %v238 = vld [vmem:[#allocation2 + $0x688] sm:$0xff]
    %v239 = vld [vmem:[#allocation2 + $0x690] sm:$0xff]
    %v240 = vld [vmem:[#allocation2 + $0x698] sm:$0xff]
    %v241 = vld [vmem:[#allocation2 + $0x6a0] sm:$0xff]
    %v242 = vld [vmem:[#allocation2 + $0x6a8] sm:$0xff]
    %v243 = vld [vmem:[#allocation2 + $0x6b0] sm:$0xff]
    %v244 = vld [vmem:[#allocation2 + $0x6b8] sm:$0xff]
    %v245 = vld [vmem:[#allocation2 + $0x6c0] sm:$0xff]
    %v246 = vld [vmem:[#allocation2 + $0x6c8] sm:$0xff]
    %v247 = vld [vmem:[#allocation2 + $0x6d0] sm:$0xff]
    %v248 = vld [vmem:[#allocation2 + $0x6d8] sm:$0xff]
    %v249 = vld [vmem:[#allocation2 + $0x6e0] sm:$0xff]
    %v250 = vld [vmem:[#allocation2 + $0x6e8] sm:$0xff]
    %v251 = vld [vmem:[#allocation2 + $0x6f0] sm:$0xff]
    %v252 = vld [vmem:[#allocation2 + $0x6f8] sm:$0xff]
    %v253 = vld [vmem:[#allocation2 + $0x700] sm:$0xff]
    %v254 = vld [vmem:[#allocation2 + $0x708] sm:$0xff]
    %v255 = vld [vmem:[#allocation2 + $0x710] sm:$0xff]
    %v256 = vld [vmem:[#allocation2 + $0x718] sm:$0xff]
    %v257 = vld [vmem:[#allocation2 + $0x720] sm:$0xff]
    %v258 = vld [vmem:[#allocation2 + $0x728] sm:$0xff]
    %v259 = vld [vmem:[#allocation2 + $0x730] sm:$0xff]
    %v260 = vld [vmem:[#allocation2 + $0x738] sm:$0xff]
    %v261 = vld [vmem:[#allocation2 + $0x740] sm:$0xff]
    %v262 = vld [vmem:[#allocation2 + $0x748] sm:$0xff]
    %v263 = vld [vmem:[#allocation2 + $0x750] sm:$0xff]
    %v264 = vld [vmem:[#allocation2 + $0x758] sm:$0xff]
    %v265 = vld [vmem:[#allocation2 + $0x760] sm:$0xff]
    %v266 = vld [vmem:[#allocation2 + $0x768] sm:$0xff]
    %v267 = vld [vmem:[#allocation2 + $0x770] sm:$0xff]
    %v268 = vld [vmem:[#allocation2 + $0x778] sm:$0xff]
    %v269 = vld [vmem:[#allocation2 + $0x780] sm:$0xff]
    %v270 = vld [vmem:[#allocation2 + $0x788] sm:$0xff]
    %v271 = vld [vmem:[#allocation2 + $0x790] sm:$0xff]
    %v272 = vld [vmem:[#allocation2 + $0x798] sm:$0xff]
    %v273 = vld [vmem:[#allocation2 + $0x7a0] sm:$0xff]
    %v274 = vld [vmem:[#allocation2 + $0x7a8] sm:$0xff]
    %v275 = vld [vmem:[#allocation2 + $0x7b0] sm:$0xff]
    %v276 = vld [vmem:[#allocation2 + $0x7b8] sm:$0xff]
    %v277 = vld [vmem:[#allocation2 + $0x7c0] sm:$0xff]
    %v278 = vld [vmem:[#allocation2 + $0x7c8] sm:$0xff]
    %v279 = vld [vmem:[#allocation2 + $0x7d0] sm:$0xff]
    %v280 = vld [vmem:[#allocation2 + $0x7d8] sm:$0xff]
    %v281 = vld [vmem:[#allocation2 + $0x7e0] sm:$0xff]
    %v282 = vld [vmem:[#allocation2 + $0x7e8] sm:$0xff]
    %v283 = vld [vmem:[#allocation2 + $0x7f0] sm:$0xff]
    %v284 = vld [vmem:[#allocation2 + $0x7f8] sm:$0xff]
    %v285 = vadd.f32 %v29, %v30
    %v286 = vadd.f32 %v285, %v31
    %v287 = vadd.f32 %v286, %v32
    %v288 = vadd.f32 %v287, %v33
    %v289 = vadd.f32 %v288, %v34
    %v290 = vadd.f32 %v289, %v35
    %v291 = vadd.f32 %v290, %v36
    %v292 = vadd.f32 %v291, %v37
    %v293 = vadd.f32 %v292, %v38
    %v294 = vadd.f32 %v293, %v39
    %v295 = vadd.f32 %v294, %v40
    %v296 = vadd.f32 %v295, %v41
    %v297 = vadd.f32 %v296, %v42
    %v298 = vadd.f32 %v297, %v43
    %v299 = vadd.f32 %v298, %v44
    %v300 = vadd.f32 %v299, %v45
    %v301 = vadd.f32 %v300, %v46
    %v302 = vadd.f32 %v301, %v47
    %v303 = vadd.f32 %v302, %v48
    %v304 = vadd.f32 %v303, %v49
    %v305 = vadd.f32 %v304, %v50
    %v306 = vadd.f32 %v305, %v51
    %v307 = vadd.f32 %v306, %v52
    %v308 = vadd.f32 %v307, %v53
    %v309 = vadd.f32 %v308, %v54
    %v310 = vadd.f32 %v309, %v55
    %v311 = vadd.f32 %v310, %v56
    %v312 = vadd.f32 %v311, %v57
    %v313 = vadd.f32 %v312, %v58
    %v314 = vadd.f32 %v313, %v59
    %v315 = vadd.f32 %v314, %v60
    %v316 = vrot.slane %v315, 4
    %v317 = vadd.f32 %v315, %v316
    %v318 = vrot.slane %v317, 2
    %v319 = vadd.f32 %v317, %v318
    %v320 = vrot.slane %v319, 1
    %v321 = vadd.f32 %v319, %v320
    %v322 = vadd.f32 %v61, %v62
    %v323 = vadd.f32 %v322, %v63
    %v324 = vadd.f32 %v323, %v64
    %v325 = vadd.f32 %v324, %v65
    %v326 = vadd.f32 %v325, %v66
    %v327 = vadd.f32 %v326, %v67
    %v328 = vadd.f32 %v327, %v68
    %v329 = vadd.f32 %v328, %v69
    %v330 = vadd.f32 %v329, %v70
    %v331 = vadd.f32 %v330, %v71
    %v332 = vadd.f32 %v331, %v72
    %v333 = vadd.f32 %v332, %v73
    %v334 = vadd.f32 %v333, %v74
    %v335 = vadd.f32 %v334, %v75
    %v336 = vadd.f32 %v335, %v76
    %v337 = vadd.f32 %v336, %v77
    %v338 = vadd.f32 %v337, %v78
    %v339 = vadd.f32 %v338, %v79
    %v340 = vadd.f32 %v339, %v80
    %v341 = vadd.f32 %v340, %v81
    %v342 = vadd.f32 %v341, %v82
    %v343 = vadd.f32 %v342, %v83
    %v344 = vadd.f32 %v343, %v84
    %v345 = vadd.f32 %v344, %v85
    %v346 = vadd.f32 %v345, %v86
    %v347 = vadd.f32 %v346, %v87
    %v348 = vadd.f32 %v347, %v88
    %v349 = vadd.f32 %v348, %v89
    %v350 = vadd.f32 %v349, %v90
    %v351 = vadd.f32 %v350, %v91
    %v352 = vadd.f32 %v351, %v92
    %v353 = vrot.slane %v352, 4
    %v354 = vadd.f32 %v352, %v353
    %v355 = vrot.slane %v354, 2
    %v356 = vadd.f32 %v354, %v355
    %v357 = vrot.slane %v356, 1
    %v358 = vadd.f32 %v356, %v357
    %v359 = vadd.f32 %v93, %v94
    %v360 = vadd.f32 %v359, %v95
    %v361 = vadd.f32 %v360, %v96
    %v362 = vadd.f32 %v361, %v97
    %v363 = vadd.f32 %v362, %v98
    %v364 = vadd.f32 %v363, %v99
    %v365 = vadd.f32 %v364, %v100
    %v366 = vadd.f32 %v365, %v101
    %v367 = vadd.f32 %v366, %v102
    %v368 = vadd.f32 %v367, %v103
    %v369 = vadd.f32 %v368, %v104
    %v370 = vadd.f32 %v369, %v105
    %v371 = vadd.f32 %v370, %v106
    %v372 = vadd.f32 %v371, %v107
    %v373 = vadd.f32 %v372, %v108
    %v374 = vadd.f32 %v373, %v109
    %v375 = vadd.f32 %v374, %v110
    %v376 = vadd.f32 %v375, %v111
    %v377 = vadd.f32 %v376, %v112
    %v378 = vadd.f32 %v377, %v113
    %v379 = vadd.f32 %v378, %v114
    %v380 = vadd.f32 %v379, %v115
    %v381 = vadd.f32 %v380, %v116
    %v382 = vadd.f32 %v381, %v117
    %v383 = vadd.f32 %v382, %v118
    %v384 = vadd.f32 %v383, %v119
    %v385 = vadd.f32 %v384, %v120
    %v386 = vadd.f32 %v385, %v121
    %v387 = vadd.f32 %v386, %v122
    %v388 = vadd.f32 %v387, %v123
    %v389 = vadd.f32 %v388, %v124
    %v390 = vrot.slane %v389, 4
    %v391 = vadd.f32 %v389, %v390
    %v392 = vrot.slane %v391, 2
    %v393 = vadd.f32 %v391, %v392
    %v394 = vrot.slane %v393, 1
    %v395 = vadd.f32 %v393, %v394
    %v396 = vadd.f32 %v125, %v126
    %v397 = vadd.f32 %v396, %v127
    %v398 = vadd.f32 %v397, %v128
    %v399 = vadd.f32 %v398, %v129
    %v400 = vadd.f32 %v399, %v130
    %v401 = vadd.f32 %v400, %v131
    %v402 = vadd.f32 %v401, %v132
    %v403 = vadd.f32 %v402, %v133
    %v404 = vadd.f32 %v403, %v134
    %v405 = vadd.f32 %v404, %v135
    %v406 = vadd.f32 %v405, %v136
    %v407 = vadd.f32 %v406, %v137
    %v408 = vadd.f32 %v407, %v138
    %v409 = vadd.f32 %v408, %v139
    %v410 = vadd.f32 %v409, %v140
    %v411 = vadd.f32 %v410, %v141
    %v412 = vadd.f32 %v411, %v142
    %v413 = vadd.f32 %v412, %v143
    %v414 = vadd.f32 %v413, %v144
    %v415 = vadd.f32 %v414, %v145
    %v416 = vadd.f32 %v415, %v146
    %v417 = vadd.f32 %v416, %v147
    %v418 = vadd.f32 %v417, %v148
    %v419 = vadd.f32 %v418, %v149
    %v420 = vadd.f32 %v419, %v150
    %v421 = vadd.f32 %v420, %v151
    %v422 = vadd.f32 %v421, %v152
    %v423 = vadd.f32 %v422, %v153
    %v424 = vadd.f32 %v423, %v154
    %v425 = vadd.f32 %v424, %v155
    %v426 = vadd.f32 %v425, %v156
    %v427 = vrot.slane %v426, 4
    %v428 = vadd.f32 %v426, %v427
    %v429 = vrot.slane %v428, 2
    %v430 = vadd.f32 %v428, %v429
    %v431 = vrot.slane %v430, 1
    %v432 = vadd.f32 %v430, %v431
    %v433 = vadd.f32 %v157, %v158
    %v434 = vadd.f32 %v433, %v159
    %v435 = vadd.f32 %v434, %v160
    %v436 = vadd.f32 %v435, %v161
    %v437 = vadd.f32 %v436, %v162
    %v438 = vadd.f32 %v437, %v163
    %v439 = vadd.f32 %v438, %v164
    %v440 = vadd.f32 %v439, %v165
    %v441 = vadd.f32 %v440, %v166
    %v442 = vadd.f32 %v441, %v167
    %v443 = vadd.f32 %v442, %v168
    %v444 = vadd.f32 %v443, %v169
    %v445 = vadd.f32 %v444, %v170
    %v446 = vadd.f32 %v445, %v171
    %v447 = vadd.f32 %v446, %v172
    %v448 = vadd.f32 %v447, %v173
    %v449 = vadd.f32 %v448, %v174
    %v450 = vadd.f32 %v449, %v175
    %v451 = vadd.f32 %v450, %v176
    %v452 = vadd.f32 %v451, %v177
    %v453 = vadd.f32 %v452, %v178
    %v454 = vadd.f32 %v453, %v179
    %v455 = vadd.f32 %v454, %v180
    %v456 = vadd.f32 %v455, %v181
    %v457 = vadd.f32 %v456, %v182
    %v458 = vadd.f32 %v457, %v183
    %v459 = vadd.f32 %v458, %v184
    %v460 = vadd.f32 %v459, %v185
    %v461 = vadd.f32 %v460, %v186
    %v462 = vadd.f32 %v461, %v187
    %v463 = vadd.f32 %v462, %v188
    %v464 = vrot.slane %v463, 4
    %v465 = vadd.f32 %v463, %v464
    %v466 = vrot.slane %v465, 2
    %v467 = vadd.f32 %v465, %v466
    %v468 = vrot.slane %v467, 1
    %v469 = vadd.f32 %v467, %v468
    %v470 = vadd.f32 %v189, %v190
    %v471 = vadd.f32 %v470, %v191
    %v472 = vadd.f32 %v471, %v192
    %v473 = vadd.f32 %v472, %v193
    %v474 = vadd.f32 %v473, %v194
    %v475 = vadd.f32 %v474, %v195
    %v476 = vadd.f32 %v475, %v196
    %v477 = vadd.f32 %v476, %v197
    %v478 = vadd.f32 %v477, %v198
    %v479 = vadd.f32 %v478, %v199
    %v480 = vadd.f32 %v479, %v200
    %v481 = vadd.f32 %v480, %v201
    %v482 = vadd.f32 %v481, %v202
    %v483 = vadd.f32 %v482, %v203
    %v484 = vadd.f32 %v483, %v204
    %v485 = vadd.f32 %v484, %v205
    %v486 = vadd.f32 %v485, %v206
    %v487 = vadd.f32 %v486, %v207
    %v488 = vadd.f32 %v487, %v208
    %v489 = vadd.f32 %v488, %v209
    %v490 = vadd.f32 %v489, %v210
    %v491 = vadd.f32 %v490, %v211
    %v492 = vadd.f32 %v491, %v212
    %v493 = vadd.f32 %v492, %v213
    %v494 = vadd.f32 %v493, %v214
    %v495 = vadd.f32 %v494, %v215
    %v496 = vadd.f32 %v495, %v216
    %v497 = vadd.f32 %v496, %v217
    %v498 = vadd.f32 %v497, %v218
    %v499 = vadd.f32 %v498, %v219
    %v500 = vadd.f32 %v499, %v220
    %v501 = vrot.slane %v500, 4
    %v502 = vadd.f32 %v500, %v501
    %v503 = vrot.slane %v502, 2
    %v504 = vadd.f32 %v502, %v503
    %v505 = vrot.slane %v504, 1
    %v506 = vadd.f32 %v504, %v505
    %v507 = vadd.f32 %v221, %v222
    %v508 = vadd.f32 %v507, %v223
    %v509 = vadd.f32 %v508, %v224
    %v510 = vadd.f32 %v509, %v225
    %v511 = vadd.f32 %v510, %v226
    %v512 = vadd.f32 %v511, %v227
    %v513 = vadd.f32 %v512, %v228
    %v514 = vadd.f32 %v513, %v229
    %v515 = vadd.f32 %v514, %v230
    %v516 = vadd.f32 %v515, %v231
    %v517 = vadd.f32 %v516, %v232
    %v518 = vadd.f32 %v517, %v233
    %v519 = vadd.f32 %v518, %v234
    %v520 = vadd.f32 %v519, %v235
    %v521 = vadd.f32 %v520, %v236
    %v522 = vadd.f32 %v521, %v237
    %v523 = vadd.f32 %v522, %v238
    %v524 = vadd.f32 %v523, %v239
    %v525 = vadd.f32 %v524, %v240
    %v526 = vadd.f32 %v525, %v241
    %v527 = vadd.f32 %v526, %v242
    %v528 = vadd.f32 %v527, %v243
    %v529 = vadd.f32 %v528, %v244
    %v530 = vadd.f32 %v529, %v245
    %v531 = vadd.f32 %v530, %v246
    %v532 = vadd.f32 %v531, %v247
    %v533 = vadd.f32 %v532, %v248
    %v534 = vadd.f32 %v533, %v249
    %v535 = vadd.f32 %v534, %v250
    %v536 = vadd.f32 %v535, %v251
    %v537 = vadd.f32 %v536, %v252
    %v538 = vrot.slane %v537, 4
    %v539 = vadd.f32 %v537, %v538
    %v540 = vrot.slane %v539, 2
    %v541 = vadd.f32 %v539, %v540
    %v542 = vrot.slane %v541, 1
    %v543 = vadd.f32 %v541, %v542
    %v544 = vadd.f32 %v253, %v254
    %v545 = vadd.f32 %v544, %v255
    %v546 = vadd.f32 %v545, %v256
    %v547 = vadd.f32 %v546, %v257
    %v548 = vadd.f32 %v547, %v258
    %v549 = vadd.f32 %v548, %v259
    %v550 = vadd.f32 %v549, %v260
    %v551 = vadd.f32 %v550, %v261
    %v552 = vadd.f32 %v551, %v262
    %v553 = vadd.f32 %v552, %v263
    %v554 = vadd.f32 %v553, %v264
    %v555 = vadd.f32 %v554, %v265
    %v556 = vadd.f32 %v555, %v266
    %v557 = vadd.f32 %v556, %v267
    %v558 = vadd.f32 %v557, %v268
    %v559 = vadd.f32 %v558, %v269
    %v560 = vadd.f32 %v559, %v270
    %v561 = vadd.f32 %v560, %v271
    %v562 = vadd.f32 %v561, %v272
    %v563 = vadd.f32 %v562, %v273
    %v564 = vadd.f32 %v563, %v274
    %v565 = vadd.f32 %v564, %v275
    %v566 = vadd.f32 %v565, %v276
    %v567 = vadd.f32 %v566, %v277
    %v568 = vadd.f32 %v567, %v278
    %v569 = vadd.f32 %v568, %v279
    %v570 = vadd.f32 %v569, %v280
    %v571 = vadd.f32 %v570, %v281
    %v572 = vadd.f32 %v571, %v282
    %v573 = vadd.f32 %v572, %v283
    %v574 = vadd.f32 %v573, %v284
    %v575 = vrot.slane %v574, 4
    %v576 = vadd.f32 %v574, %v575
    %v577 = vrot.slane %v576, 2
    %v578 = vadd.f32 %v576, %v577
    %v579 = vrot.slane %v578, 1
    %v580 = vadd.f32 %v578, %v579
    %v581 = vrcp.pop 256.0
    %v582 = vmul.f32 %v321, %v581
    %v583 = vmul.f32 %v358, %v581
    %v584 = vmul.f32 %v395, %v581
    %v585 = vmul.f32 %v432, %v581
    %v586 = vmul.f32 %v469, %v581
    %v587 = vmul.f32 %v506, %v581
    %v588 = vmul.f32 %v543, %v581
    %v589 = vmul.f32 %v580, %v581
    %v590 = vld [vmem:[%s1] sm:$0xff]
    %v591 = vld [vmem:[%s1 + $0x8] sm:$0xff]
    %v592 = vld [vmem:[%s1 + $0x10] sm:$0xff]
    %v593 = vld [vmem:[%s1 + $0x18] sm:$0xff]
    %v594 = vld [vmem:[%s1 + $0x20] sm:$0xff]
    %v595 = vld [vmem:[%s1 + $0x28] sm:$0xff]
    %v596 = vld [vmem:[%s1 + $0x30] sm:$0xff]
    %v597 = vld [vmem:[%s1 + $0x38] sm:$0xff]
    %v598 = vld [vmem:[%s1 + $0x40] sm:$0xff]
    %v599 = vld [vmem:[%s1 + $0x48] sm:$0xff]
    %v600 = vld [vmem:[%s1 + $0x50] sm:$0xff]
    %v601 = vld [vmem:[%s1 + $0x58] sm:$0xff]
    %v602 = vld [vmem:[%s1 + $0x60] sm:$0xff]
    %v603 = vld [vmem:[%s1 + $0x68] sm:$0xff]
    %v604 = vld [vmem:[%s1 + $0x70] sm:$0xff]
    %v605 = vld [vmem:[%s1 + $0x78] sm:$0xff]
    %vm614 = vcmask 1041409
    %v615 = vsel %vm614, %v583, %v582
    %vm616 = vcmask 1042434
    %v617 = vsel %vm616, %v584, %v615
    %vm618 = vcmask 1043459
    %v619 = vsel %vm618, %v585, %v617
    %vm620 = vcmask 1044484
    %v621 = vsel %vm620, %v586, %v619
    %vm622 = vcmask 1045509
    %v623 = vsel %vm622, %v587, %v621
    %vm624 = vcmask 1046534
    %v625 = vsel %vm624, %v588, %v623
    %vm626 = vcmask 1047559
    %v627 = vsel %vm626, %v589, %v625
    %629 = vmatprep.subr.mxu0 0.0
    %630 = vmatpush1.msra.mxu0 %v590
    %631 = vmatprep.subr.mxu0 0.0
    %632 = vmatpush1.msra.mxu0 %v591
    %633 = vmatprep.subr.mxu0 0.0
    %634 = vmatpush1.msra.mxu0 %v592
    %635 = vmatprep.subr.mxu0 0.0
    %636 = vmatpush1.msra.mxu0 %v593
    %637 = vmatprep.subr.mxu0 0.0
    %638 = vmatpush1.msra.mxu0 %v594
    %639 = vmatprep.subr.mxu0 0.0
    %640 = vmatpush1.msra.mxu0 %v595
    %641 = vmatprep.subr.mxu0 0.0
    %642 = vmatpush1.msra.mxu0 %v596
    %643 = vmatprep.subr.mxu0 0.0
    %644 = vmatpush1.msra.mxu0 %v597
    %645 = vmatprep.subr.mxu0 0.0
    %646 = vmatpush1.msra.mxu0 %v598
    %647 = vmatprep.subr.mxu0 0.0
    %648 = vmatpush1.msra.mxu0 %v599
    %649 = vmatprep.subr.mxu0 0.0
    %650 = vmatpush1.msra.mxu0 %v600
    %651 = vmatprep.subr.mxu0 0.0
    %652 = vmatpush1.msra.mxu0 %v601
    %653 = vmatprep.subr.mxu0 0.0
    %654 = vmatpush1.msra.mxu0 %v602
    %655 = vmatprep.subr.mxu0 0.0
    %656 = vmatpush1.msra.mxu0 %v603
    %657 = vmatprep.subr.mxu0 0.0
    %658 = vmatpush1.msra.mxu0 %v604
    %659 = vmatprep.subr.mxu0 0.0
    %660 = vmatpush1.msra.mxu0 %v605
    %661 = vmatprep.subr.mxu0 0.0
    %662 = vmatpush1.msra.mxu0 0.0
    %663 = vmatprep.subr.mxu0 0.0
    %664 = vmatpush1.msra.mxu0 0.0
    %665 = vmatprep.subr.mxu0 0.0
    %666 = vmatpush1.msra.mxu0 0.0
    %667 = vmatprep.subr.mxu0 0.0
    %668 = vmatpush1.msra.mxu0 0.0
    %669 = vmatprep.subr.mxu0 0.0
    %670 = vmatpush1.msra.mxu0 0.0
    %671 = vmatprep.subr.mxu0 0.0
    %672 = vmatpush1.msra.mxu0 0.0
    %673 = vmatprep.subr.mxu0 0.0
    %674 = vmatpush1.msra.mxu0 0.0
    %675 = vmatprep.subr.mxu0 0.0
    %676 = vmatpush1.msra.mxu0 0.0
    %677 = vmatprep.subr.mxu0 0.0
    %678 = vmatpush1.msra.mxu0 0.0
    %679 = vmatprep.subr.mxu0 0.0
    %680 = vmatpush1.msra.mxu0 0.0
    %681 = vmatprep.subr.mxu0 0.0
    %682 = vmatpush1.msra.mxu0 0.0
    %683 = vmatprep.subr.mxu0 0.0
    %684 = vmatpush1.msra.mxu0 0.0
    %685 = vmatprep.subr.mxu0 0.0
    %686 = vmatpush1.msra.mxu0 0.0
    %687 = vmatprep.subr.mxu0 0.0
    %688 = vmatpush1.msra.mxu0 0.0
    %689 = vmatprep.subr.mxu0 0.0
    %690 = vmatpush1.msra.mxu0 0.0
    %691 = vmatprep.subr.mxu0 0.0
    %692 = vmatpush1.msra.mxu0 0.0
    %693 = vmatprep.mubr.f32.mxu0 0.0
    %694 = vmatmul.mubr.f32.gmra.mrb[0].mxu0 %v627
    %v695 = vpop.f32.mrb[0].mxu0
    %v696 = vadd.f32 0.0, %v695
    %v697 = vpop.f32.mrb[0].mxu0
    %698 = vdwg.mxu0
    %v699 = vmax.f32 %v696, 0.0
    %v700 = vld [vmem:[%s2] sm:$0xff]
    %vm701 = vcmask 64512
    %v703 = vsel %vm701, %v699, 0
    %705 = vmatprep.subr.mxu0 0.0
    %706 = vmatpush1.msra.mxu0 %v700
    %707 = vmatprep.subr.mxu0 0.0
    %708 = vmatpush1.msra.mxu0 0.0
    %709 = vmatprep.subr.mxu0 0.0
    %710 = vmatpush1.msra.mxu0 0.0
    %711 = vmatprep.subr.mxu0 0.0
    %712 = vmatpush1.msra.mxu0 0.0
    %713 = vmatprep.subr.mxu0 0.0
    %714 = vmatpush1.msra.mxu0 0.0
    %715 = vmatprep.subr.mxu0 0.0
    %716 = vmatpush1.msra.mxu0 0.0
    %717 = vmatprep.subr.mxu0 0.0
    %718 = vmatpush1.msra.mxu0 0.0
    %719 = vmatprep.subr.mxu0 0.0
    %720 = vmatpush1.msra.mxu0 0.0
    %721 = vmatprep.subr.mxu0 0.0
    %722 = vmatpush1.msra.mxu0 0.0
    %723 = vmatprep.subr.mxu0 0.0
    %724 = vmatpush1.msra.mxu0 0.0
    %725 = vmatprep.subr.mxu0 0.0
    %726 = vmatpush1.msra.mxu0 0.0
    %727 = vmatprep.subr.mxu0 0.0
    %728 = vmatpush1.msra.mxu0 0.0
    %729 = vmatprep.subr.mxu0 0.0
    %730 = vmatpush1.msra.mxu0 0.0
    %731 = vmatprep.subr.mxu0 0.0
    %732 = vmatpush1.msra.mxu0 0.0
    %733 = vmatprep.subr.mxu0 0.0
    %734 = vmatpush1.msra.mxu0 0.0
    %735 = vmatprep.subr.mxu0 0.0
    %736 = vmatpush1.msra.mxu0 0.0
    %737 = vmatprep.subr.mxu0 0.0
    %738 = vmatpush1.msra.mxu0 0.0
    %739 = vmatprep.subr.mxu0 0.0
    %740 = vmatpush1.msra.mxu0 0.0
    %741 = vmatprep.subr.mxu0 0.0
    %742 = vmatpush1.msra.mxu0 0.0
    %743 = vmatprep.subr.mxu0 0.0
    %744 = vmatpush1.msra.mxu0 0.0
    %745 = vmatprep.subr.mxu0 0.0
    %746 = vmatpush1.msra.mxu0 0.0
    %747 = vmatprep.subr.mxu0 0.0
    %748 = vmatpush1.msra.mxu0 0.0
    %749 = vmatprep.subr.mxu0 0.0
    %750 = vmatpush1.msra.mxu0 0.0
    %751 = vmatprep.subr.mxu0 0.0
    %752 = vmatpush1.msra.mxu0 0.0
    %753 = vmatprep.subr.mxu0 0.0
    %754 = vmatpush1.msra.mxu0 0.0
    %755 = vmatprep.subr.mxu0 0.0
    %756 = vmatpush1.msra.mxu0 0.0
    %757 = vmatprep.subr.mxu0 0.0
    %758 = vmatpush1.msra.mxu0 0.0
    %759 = vmatprep.subr.mxu0 0.0
    %760 = vmatpush1.msra.mxu0 0.0
    %761 = vmatprep.subr.mxu0 0.0
    %762 = vmatpush1.msra.mxu0 0.0
    %763 = vmatprep.subr.mxu0 0.0
    %764 = vmatpush1.msra.mxu0 0.0
    %765 = vmatprep.subr.mxu0 0.0
    %766 = vmatpush1.msra.mxu0 0.0
    %767 = vmatprep.subr.mxu0 0.0
    %768 = vmatpush1.msra.mxu0 0.0
    %769 = vmatprep.mubr.f32.mxu0 0.0
    %770 = vmatmul.mubr.f32.gmra.mrb[0].mxu0 %v703
    %v771 = vpop.f32.mrb[0].mxu0
    %v772 = vadd.f32 0.0, %v771
    %v773 = vpop.f32.mrb[0].mxu0
    %774 = vdwg.mxu0
    %v775 = vxor.u32 %v772, 2147483648
    %v776 = vmul.f32 %v775, 1.442695
    %v777 = vpow.pop %v776
    %v778 = vadd.f32 %v777, 1.0
    %v779 = vrcp.pop %v778
    %v780 = vmul.f32 1.0, %v779
    %v782 = vcombine.high %v780, %v780
    %v784 = vunpack.c.l.s4 1966171168
    %v785 = vunpack.c.0.s8 %v784
    %v786 = vlaneseq
    %v787 = vshrl.u32 %v786, 7
    %v788 = vsub.s32 %v785, %v787
    %v789 = vrot.slane %v780, %v788
    %v791 = vunpack.c.l.s4 1966171168
    %v792 = vunpack.c.0.s8 %v791
    %v793 = vlaneseq
    %v794 = vshrl.u32 %v793, 7
    %v795 = vsub.s32 %v792, %v794
    %v796 = vrot.slane %v782, %v795
    %v797 = vcombine.high %v789, %v789
    %v798 = vcombine.high %v796, %v796
    %v800 = vunpack.c.l.s4 1966171168
    %v801 = vunpack.c.0.s8 %v800
    %v802 = vlaneseq
    %v803 = vshrl.u32 %v802, 7
    %v804 = vsub.s32 %v801, %v803
    %v805 = vrot.slane %v789, %v804
    %v807 = vunpack.c.l.s4 1966171168
    %v808 = vunpack.c.0.s8 %v807
    %v809 = vlaneseq
    %v810 = vshrl.u32 %v809, 7
    %v811 = vsub.s32 %v808, %v810
    %v812 = vrot.slane %v796, %v811
    %v814 = vunpack.c.l.s4 1966171168
    %v815 = vunpack.c.0.s8 %v814
    %v816 = vlaneseq
    %v817 = vshrl.u32 %v816, 7
    %v818 = vsub.s32 %v815, %v817
    %v819 = vrot.slane %v797, %v818
    %v821 = vunpack.c.l.s4 1966171168
    %v822 = vunpack.c.0.s8 %v821
    %v823 = vlaneseq
    %v824 = vshrl.u32 %v823, 7
    %v825 = vsub.s32 %v822, %v824
    %v826 = vrot.slane %v798, %v825
    %v827 = vcombine.high %v805, %v805
    %v828 = vcombine.high %v812, %v812
    %v829 = vcombine.high %v819, %v819
    %v830 = vcombine.high %v826, %v826
    %v831 = vlaneseq
    %v832 = vshrl.u32 %v831, 7
    %v833 = vsub.s32 0, %v832
    %v834 = vrot.slane %v805, %v833
    %v835 = vlaneseq
    %v836 = vshrl.u32 %v835, 7
    %v837 = vsub.s32 0, %v836
    %v838 = vrot.slane %v819, %v837
    %v839 = vlaneseq
    %v840 = vshrl.u32 %v839, 7
    %v841 = vsub.s32 0, %v840
    %v842 = vrot.slane %v827, %v841
    %v843 = vlaneseq
    %v844 = vshrl.u32 %v843, 7
    %v845 = vsub.s32 0, %v844
    %v846 = vrot.slane %v829, %v845
    %v847 = vlaneseq
    %v848 = vshrl.u32 %v847, 7
    %v849 = vsub.s32 0, %v848
    %v850 = vrot.slane %v812, %v849
    %v851 = vlaneseq
    %v852 = vshrl.u32 %v851, 7
    %v853 = vsub.s32 0, %v852
    %v854 = vrot.slane %v826, %v853
    %v855 = vlaneseq
    %v856 = vshrl.u32 %v855, 7
    %v857 = vsub.s32 0, %v856
    %v858 = vrot.slane %v828, %v857
    %v859 = vlaneseq
    %v860 = vshrl.u32 %v859, 7
    %v861 = vsub.s32 0, %v860
    %v862 = vrot.slane %v830, %v861
    %v871 = vmul.f32 %v29, %v834
    %v872 = vmul.f32 %v30, %v834
    %v873 = vmul.f32 %v31, %v834
    %v874 = vmul.f32 %v32, %v834
    %v875 = vmul.f32 %v33, %v834
    %v876 = vmul.f32 %v34, %v834
    %v877 = vmul.f32 %v35, %v834
    %v878 = vmul.f32 %v36, %v834
    %v879 = vmul.f32 %v37, %v834
    %v880 = vmul.f32 %v38, %v834
    %v881 = vmul.f32 %v39, %v834
    %v882 = vmul.f32 %v40, %v834
    %v883 = vmul.f32 %v41, %v834
    %v884 = vmul.f32 %v42, %v834
    %v885 = vmul.f32 %v43, %v834
    %v886 = vmul.f32 %v44, %v834
    %v887 = vmul.f32 %v45, %v834
    %v888 = vmul.f32 %v46, %v834
    %v889 = vmul.f32 %v47, %v834
    %v890 = vmul.f32 %v48, %v834
    %v891 = vmul.f32 %v49, %v834
    %v892 = vmul.f32 %v50, %v834
    %v893 = vmul.f32 %v51, %v834
    %v894 = vmul.f32 %v52, %v834
    %v895 = vmul.f32 %v53, %v834
    %v896 = vmul.f32 %v54, %v834
    %v897 = vmul.f32 %v55, %v834
    %v898 = vmul.f32 %v56, %v834
    %v899 = vmul.f32 %v57, %v834
    %v900 = vmul.f32 %v58, %v834
    %v901 = vmul.f32 %v59, %v834
    %v902 = vmul.f32 %v60, %v834
    %v903 = vmul.f32 %v61, %v838
    %v904 = vmul.f32 %v62, %v838
    %v905 = vmul.f32 %v63, %v838
    %v906 = vmul.f32 %v64, %v838
    %v907 = vmul.f32 %v65, %v838
    %v908 = vmul.f32 %v66, %v838
    %v909 = vmul.f32 %v67, %v838
    %v910 = vmul.f32 %v68, %v838
    %v911 = vmul.f32 %v69, %v838
    %v912 = vmul.f32 %v70, %v838
    %v913 = vmul.f32 %v71, %v838
    %v914 = vmul.f32 %v72, %v838
    %v915 = vmul.f32 %v73, %v838
    %v916 = vmul.f32 %v74, %v838
    %v917 = vmul.f32 %v75, %v838
    %v918 = vmul.f32 %v76, %v838
    %v919 = vmul.f32 %v77, %v838
    %v920 = vmul.f32 %v78, %v838
    %v921 = vmul.f32 %v79, %v838
    %v922 = vmul.f32 %v80, %v838
    %v923 = vmul.f32 %v81, %v838
    %v924 = vmul.f32 %v82, %v838
    %v925 = vmul.f32 %v83, %v838
    %v926 = vmul.f32 %v84, %v838
    %v927 = vmul.f32 %v85, %v838
    %v928 = vmul.f32 %v86, %v838
    %v929 = vmul.f32 %v87, %v838
    %v930 = vmul.f32 %v88, %v838
    %v931 = vmul.f32 %v89, %v838
    %v932 = vmul.f32 %v90, %v838
    %v933 = vmul.f32 %v91, %v838
    %v934 = vmul.f32 %v92, %v838
    %v935 = vmul.f32 %v93, %v842
    %v936 = vmul.f32 %v94, %v842
    %v937 = vmul.f32 %v95, %v842
    %v938 = vmul.f32 %v96, %v842
    %v939 = vmul.f32 %v97, %v842
    %v940 = vmul.f32 %v98, %v842
    %v941 = vmul.f32 %v99, %v842
    %v942 = vmul.f32 %v100, %v842
    %v943 = vmul.f32 %v101, %v842
    %v944 = vmul.f32 %v102, %v842
    %v945 = vmul.f32 %v103, %v842
    %v946 = vmul.f32 %v104, %v842
    %v947 = vmul.f32 %v105, %v842
    %v948 = vmul.f32 %v106, %v842
    %v949 = vmul.f32 %v107, %v842
    %v950 = vmul.f32 %v108, %v842
    %v951 = vmul.f32 %v109, %v842
    %v952 = vmul.f32 %v110, %v842
    %v953 = vmul.f32 %v111, %v842
    %v954 = vmul.f32 %v112, %v842
    %v955 = vmul.f32 %v113, %v842
    %v956 = vmul.f32 %v114, %v842
    %v957 = vmul.f32 %v115, %v842
    %v958 = vmul.f32 %v116, %v842
    %v959 = vmul.f32 %v117, %v842
    %v960 = vmul.f32 %v118, %v842
    %v961 = vmul.f32 %v119, %v842
    %v962 = vmul.f32 %v120, %v842
    %v963 = vmul.f32 %v121, %v842
    %v964 = vmul.f32 %v122, %v842
    %v965 = vmul.f32 %v123, %v842
    %v966 = vmul.f32 %v124, %v842
    %v967 = vmul.f32 %v125, %v846
    %v968 = vmul.f32 %v126, %v846
    %v969 = vmul.f32 %v127, %v846
    %v970 = vmul.f32 %v128, %v846
    %v971 = vmul.f32 %v129, %v846
    %v972 = vmul.f32 %v130, %v846
    %v973 = vmul.f32 %v131, %v846
    %v974 = vmul.f32 %v132, %v846
    %v975 = vmul.f32 %v133, %v846
    %v976 = vmul.f32 %v134, %v846
    %v977 = vmul.f32 %v135, %v846
    %v978 = vmul.f32 %v136, %v846
    %v979 = vmul.f32 %v137, %v846
    %v980 = vmul.f32 %v138, %v846
    %v981 = vmul.f32 %v139, %v846
    %v982 = vmul.f32 %v140, %v846
    %v983 = vmul.f32 %v141, %v846
    %v984 = vmul.f32 %v142, %v846
    %v985 = vmul.f32 %v143, %v846
    %v986 = vmul.f32 %v144, %v846
    %v987 = vmul.f32 %v145, %v846
    %v988 = vmul.f32 %v146, %v846
    %v989 = vmul.f32 %v147, %v846
    %v990 = vmul.f32 %v148, %v846
    %v991 = vmul.f32 %v149, %v846
    %v992 = vmul.f32 %v150, %v846
    %v993 = vmul.f32 %v151, %v846
    %v994 = vmul.f32 %v152, %v846
    %v995 = vmul.f32 %v153, %v846
    %v996 = vmul.f32 %v154, %v846
    %v997 = vmul.f32 %v155, %v846
    %v998 = vmul.f32 %v156, %v846
    %v999 = vmul.f32 %v157, %v850
    %v1000 = vmul.f32 %v158, %v850
    %v1001 = vmul.f32 %v159, %v850
    %v1002 = vmul.f32 %v160, %v850
    %v1003 = vmul.f32 %v161, %v850
    %v1004 = vmul.f32 %v162, %v850
    %v1005 = vmul.f32 %v163, %v850
    %v1006 = vmul.f32 %v164, %v850
    %v1007 = vmul.f32 %v165, %v850
    %v1008 = vmul.f32 %v166, %v850
    %v1009 = vmul.f32 %v167, %v850
    %v1010 = vmul.f32 %v168, %v850
    %v1011 = vmul.f32 %v169, %v850
    %v1012 = vmul.f32 %v170, %v850
    %v1013 = vmul.f32 %v171, %v850
    %v1014 = vmul.f32 %v172, %v850
    %v1015 = vmul.f32 %v173, %v850
    %v1016 = vmul.f32 %v174, %v850
    %v1017 = vmul.f32 %v175, %v850
    %v1018 = vmul.f32 %v176, %v850
    %v1019 = vmul.f32 %v177, %v850
    %v1020 = vmul.f32 %v178, %v850
    %v1021 = vmul.f32 %v179, %v850
    %v1022 = vmul.f32 %v180, %v850
    %v1023 = vmul.f32 %v181, %v850
    %v1024 = vmul.f32 %v182, %v850
    %v1025 = vmul.f32 %v183, %v850
    %v1026 = vmul.f32 %v184, %v850
    %v1027 = vmul.f32 %v185, %v850
    %v1028 = vmul.f32 %v186, %v850
    %v1029 = vmul.f32 %v187, %v850
    %v1030 = vmul.f32 %v188, %v850
    %v1031 = vmul.f32 %v189, %v854
    %v1032 = vmul.f32 %v190, %v854
    %v1033 = vmul.f32 %v191, %v854
    %v1034 = vmul.f32 %v192, %v854
    %v1035 = vmul.f32 %v193, %v854
    %v1036 = vmul.f32 %v194, %v854
    %v1037 = vmul.f32 %v195, %v854
    %v1038 = vmul.f32 %v196, %v854
    %v1039 = vmul.f32 %v197, %v854
    %v1040 = vmul.f32 %v198, %v854
    %v1041 = vmul.f32 %v199, %v854
    %v1042 = vmul.f32 %v200, %v854
    %v1043 = vmul.f32 %v201, %v854
    %v1044 = vmul.f32 %v202, %v854
    %v1045 = vmul.f32 %v203, %v854
    %v1046 = vmul.f32 %v204, %v854
    %v1047 = vmul.f32 %v205, %v854
    %v1048 = vmul.f32 %v206, %v854
    %v1049 = vmul.f32 %v207, %v854
    %v1050 = vmul.f32 %v208, %v854
    %v1051 = vmul.f32 %v209, %v854
    %v1052 = vmul.f32 %v210, %v854
    %v1053 = vmul.f32 %v211, %v854
    %v1054 = vmul.f32 %v212, %v854
    %v1055 = vmul.f32 %v213, %v854
    %v1056 = vmul.f32 %v214, %v854
    %v1057 = vmul.f32 %v215, %v854
    %v1058 = vmul.f32 %v216, %v854
    %v1059 = vmul.f32 %v217, %v854
    %v1060 = vmul.f32 %v218, %v854
    %v1061 = vmul.f32 %v219, %v854
    %v1062 = vmul.f32 %v220, %v854
    %v1063 = vmul.f32 %v221, %v858
    %v1064 = vmul.f32 %v222, %v858
    %v1065 = vmul.f32 %v223, %v858
    %v1066 = vmul.f32 %v224, %v858
    %v1067 = vmul.f32 %v225, %v858
    %v1068 = vmul.f32 %v226, %v858
    %v1069 = vmul.f32 %v227, %v858
    %v1070 = vmul.f32 %v228, %v858
    %v1071 = vmul.f32 %v229, %v858
    %v1072 = vmul.f32 %v230, %v858
    %v1073 = vmul.f32 %v231, %v858
    %v1074 = vmul.f32 %v232, %v858
    %v1075 = vmul.f32 %v233, %v858
    %v1076 = vmul.f32 %v234, %v858
    %v1077 = vmul.f32 %v235, %v858
    %v1078 = vmul.f32 %v236, %v858
    %v1079 = vmul.f32 %v237, %v858
    %v1080 = vmul.f32 %v238, %v858
    %v1081 = vmul.f32 %v239, %v858
    %v1082 = vmul.f32 %v240, %v858
    %v1083 = vmul.f32 %v241, %v858
    %v1084 = vmul.f32 %v242, %v858
    %v1085 = vmul.f32 %v243, %v858
    %v1086 = vmul.f32 %v244, %v858
    %v1087 = vmul.f32 %v245, %v858
    %v1088 = vmul.f32 %v246, %v858
    %v1089 = vmul.f32 %v247, %v858
    %v1090 = vmul.f32 %v248, %v858
    %v1091 = vmul.f32 %v249, %v858
    %v1092 = vmul.f32 %v250, %v858
    %v1093 = vmul.f32 %v251, %v858
    %v1094 = vmul.f32 %v252, %v858
    %v1095 = vmul.f32 %v253, %v862
    %v1096 = vmul.f32 %v254, %v862
    %v1097 = vmul.f32 %v255, %v862
    %v1098 = vmul.f32 %v256, %v862
    %v1099 = vmul.f32 %v257, %v862
    %v1100 = vmul.f32 %v258, %v862
    %v1101 = vmul.f32 %v259, %v862
    %v1102 = vmul.f32 %v260, %v862
    %v1103 = vmul.f32 %v261, %v862
    %v1104 = vmul.f32 %v262, %v862
    %v1105 = vmul.f32 %v263, %v862
    %v1106 = vmul.f32 %v264, %v862
    %v1107 = vmul.f32 %v265, %v862
    %v1108 = vmul.f32 %v266, %v862
    %v1109 = vmul.f32 %v267, %v862
    %v1110 = vmul.f32 %v268, %v862
    %v1111 = vmul.f32 %v269, %v862
    %v1112 = vmul.f32 %v270, %v862
    %v1113 = vmul.f32 %v271, %v862
    %v1114 = vmul.f32 %v272, %v862
    %v1115 = vmul.f32 %v273, %v862
    %v1116 = vmul.f32 %v274, %v862
    %v1117 = vmul.f32 %v275, %v862
    %v1118 = vmul.f32 %v276, %v862
    %v1119 = vmul.f32 %v277, %v862
    %v1120 = vmul.f32 %v278, %v862
    %v1121 = vmul.f32 %v279, %v862
    %v1122 = vmul.f32 %v280, %v862
    %v1123 = vmul.f32 %v281, %v862
    %v1124 = vmul.f32 %v282, %v862
    %v1125 = vmul.f32 %v283, %v862
    %v1126 = vmul.f32 %v284, %v862
    %1127 = vst [vmem:[#allocation5] sm:$0xff] %v871
    %1128 = vst [vmem:[#allocation5 + $0x8] sm:$0xff] %v872
    %1129 = vst [vmem:[#allocation5 + $0x10] sm:$0xff] %v873
    %1130 = vst [vmem:[#allocation5 + $0x18] sm:$0xff] %v874
    %1131 = vst [vmem:[#allocation5 + $0x20] sm:$0xff] %v875
    %1132 = vst [vmem:[#allocation5 + $0x28] sm:$0xff] %v876
    %1133 = vst [vmem:[#allocation5 + $0x30] sm:$0xff] %v877
    %1134 = vst [vmem:[#allocation5 + $0x38] sm:$0xff] %v878
    %1135 = vst [vmem:[#allocation5 + $0x40] sm:$0xff] %v879
    %1136 = vst [vmem:[#allocation5 + $0x48] sm:$0xff] %v880
    %1137 = vst [vmem:[#allocation5 + $0x50] sm:$0xff] %v881
    %1138 = vst [vmem:[#allocation5 + $0x58] sm:$0xff] %v882
    %1139 = vst [vmem:[#allocation5 + $0x60] sm:$0xff] %v883
    %1140 = vst [vmem:[#allocation5 + $0x68] sm:$0xff] %v884
    %1141 = vst [vmem:[#allocation5 + $0x70] sm:$0xff] %v885
    %1142 = vst [vmem:[#allocation5 + $0x78] sm:$0xff] %v886
    %1143 = vst [vmem:[#allocation5 + $0x80] sm:$0xff] %v887
    %1144 = vst [vmem:[#allocation5 + $0x88] sm:$0xff] %v888
    %1145 = vst [vmem:[#allocation5 + $0x90] sm:$0xff] %v889
    %1146 = vst [vmem:[#allocation5 + $0x98] sm:$0xff] %v890
    %1147 = vst [vmem:[#allocation5 + $0xa0] sm:$0xff] %v891
    %1148 = vst [vmem:[#allocation5 + $0xa8] sm:$0xff] %v892
    %1149 = vst [vmem:[#allocation5 + $0xb0] sm:$0xff] %v893
    %1150 = vst [vmem:[#allocation5 + $0xb8] sm:$0xff] %v894
    %1151 = vst [vmem:[#allocation5 + $0xc0] sm:$0xff] %v895
    %1152 = vst [vmem:[#allocation5 + $0xc8] sm:$0xff] %v896
    %1153 = vst [vmem:[#allocation5 + $0xd0] sm:$0xff] %v897
    %1154 = vst [vmem:[#allocation5 + $0xd8] sm:$0xff] %v898
    %1155 = vst [vmem:[#allocation5 + $0xe0] sm:$0xff] %v899
    %1156 = vst [vmem:[#allocation5 + $0xe8] sm:$0xff] %v900
    %1157 = vst [vmem:[#allocation5 + $0xf0] sm:$0xff] %v901
    %1158 = vst [vmem:[#allocation5 + $0xf8] sm:$0xff] %v902
    %1159 = vst [vmem:[#allocation5 + $0x100] sm:$0xff] %v903
    %1160 = vst [vmem:[#allocation5 + $0x108] sm:$0xff] %v904
    %1161 = vst [vmem:[#allocation5 + $0x110] sm:$0xff] %v905
    %1162 = vst [vmem:[#allocation5 + $0x118] sm:$0xff] %v906
    %1163 = vst [vmem:[#allocation5 + $0x120] sm:$0xff] %v907
    %1164 = vst [vmem:[#allocation5 + $0x128] sm:$0xff] %v908
    %1165 = vst [vmem:[#allocation5 + $0x130] sm:$0xff] %v909
    %1166 = vst [vmem:[#allocation5 + $0x138] sm:$0xff] %v910
    %1167 = vst [vmem:[#allocation5 + $0x140] sm:$0xff] %v911
    %1168 = vst [vmem:[#allocation5 + $0x148] sm:$0xff] %v912
    %1169 = vst [vmem:[#allocation5 + $0x150] sm:$0xff] %v913
    %1170 = vst [vmem:[#allocation5 + $0x158] sm:$0xff] %v914
    %1171 = vst [vmem:[#allocation5 + $0x160] sm:$0xff] %v915
    %1172 = vst [vmem:[#allocation5 + $0x168] sm:$0xff] %v916
    %1173 = vst [vmem:[#allocation5 + $0x170] sm:$0xff] %v917
    %1174 = vst [vmem:[#allocation5 + $0x178] sm:$0xff] %v918
    %1175 = vst [vmem:[#allocation5 + $0x180] sm:$0xff] %v919
    %1176 = vst [vmem:[#allocation5 + $0x188] sm:$0xff] %v920
    %1177 = vst [vmem:[#allocation5 + $0x190] sm:$0xff] %v921
    %1178 = vst [vmem:[#allocation5 + $0x198] sm:$0xff] %v922
    %1179 = vst [vmem:[#allocation5 + $0x1a0] sm:$0xff] %v923
    %1180 = vst [vmem:[#allocation5 + $0x1a8] sm:$0xff] %v924
    %1181 = vst [vmem:[#allocation5 + $0x1b0] sm:$0xff] %v925
    %1182 = vst [vmem:[#allocation5 + $0x1b8] sm:$0xff] %v926
    %1183 = vst [vmem:[#allocation5 + $0x1c0] sm:$0xff] %v927
    %1184 = vst [vmem:[#allocation5 + $0x1c8] sm:$0xff] %v928
    %1185 = vst [vmem:[#allocation5 + $0x1d0] sm:$0xff] %v929
    %1186 = vst [vmem:[#allocation5 + $0x1d8] sm:$0xff] %v930
    %1187 = vst [vmem:[#allocation5 + $0x1e0] sm:$0xff] %v931
    %1188 = vst [vmem:[#allocation5 + $0x1e8] sm:$0xff] %v932
    %1189 = vst [vmem:[#allocation5 + $0x1f0] sm:$0xff] %v933
    %1190 = vst [vmem:[#allocation5 + $0x1f8] sm:$0xff] %v934
    %1191 = vst [vmem:[#allocation5 + $0x200] sm:$0xff] %v935
    %1192 = vst [vmem:[#allocation5 + $0x208] sm:$0xff] %v936
    %1193 = vst [vmem:[#allocation5 + $0x210] sm:$0xff] %v937
    %1194 = vst [vmem:[#allocation5 + $0x218] sm:$0xff] %v938
    %1195 = vst [vmem:[#allocation5 + $0x220] sm:$0xff] %v939
    %1196 = vst [vmem:[#allocation5 + $0x228] sm:$0xff] %v940
    %1197 = vst [vmem:[#allocation5 + $0x230] sm:$0xff] %v941
    %1198 = vst [vmem:[#allocation5 + $0x238] sm:$0xff] %v942
    %1199 = vst [vmem:[#allocation5 + $0x240] sm:$0xff] %v943
    %1200 = vst [vmem:[#allocation5 + $0x248] sm:$0xff] %v944
    %1201 = vst [vmem:[#allocation5 + $0x250] sm:$0xff] %v945
    %1202 = vst [vmem:[#allocation5 + $0x258] sm:$0xff] %v946
    %1203 = vst [vmem:[#allocation5 + $0x260] sm:$0xff] %v947
    %1204 = vst [vmem:[#allocation5 + $0x268] sm:$0xff] %v948
    %1205 = vst [vmem:[#allocation5 + $0x270] sm:$0xff] %v949
    %1206 = vst [vmem:[#allocation5 + $0x278] sm:$0xff] %v950
    %1207 = vst [vmem:[#allocation5 + $0x280] sm:$0xff] %v951
    %1208 = vst [vmem:[#allocation5 + $0x288] sm:$0xff] %v952
    %1209 = vst [vmem:[#allocation5 + $0x290] sm:$0xff] %v953
    %1210 = vst [vmem:[#allocation5 + $0x298] sm:$0xff] %v954
    %1211 = vst [vmem:[#allocation5 + $0x2a0] sm:$0xff] %v955
    %1212 = vst [vmem:[#allocation5 + $0x2a8] sm:$0xff] %v956
    %1213 = vst [vmem:[#allocation5 + $0x2b0] sm:$0xff] %v957
    %1214 = vst [vmem:[#allocation5 + $0x2b8] sm:$0xff] %v958
    %1215 = vst [vmem:[#allocation5 + $0x2c0] sm:$0xff] %v959
    %1216 = vst [vmem:[#allocation5 + $0x2c8] sm:$0xff] %v960
    %1217 = vst [vmem:[#allocation5 + $0x2d0] sm:$0xff] %v961
    %1218 = vst [vmem:[#allocation5 + $0x2d8] sm:$0xff] %v962
    %1219 = vst [vmem:[#allocation5 + $0x2e0] sm:$0xff] %v963
    %1220 = vst [vmem:[#allocation5 + $0x2e8] sm:$0xff] %v964
    %1221 = vst [vmem:[#allocation5 + $0x2f0] sm:$0xff] %v965
    %1222 = vst [vmem:[#allocation5 + $0x2f8] sm:$0xff] %v966
    %1223 = vst [vmem:[#allocation5 + $0x300] sm:$0xff] %v967
    %1224 = vst [vmem:[#allocation5 + $0x308] sm:$0xff] %v968
    %1225 = vst [vmem:[#allocation5 + $0x310] sm:$0xff] %v969
    %1226 = vst [vmem:[#allocation5 + $0x318] sm:$0xff] %v970
    %1227 = vst [vmem:[#allocation5 + $0x320] sm:$0xff] %v971
    %1228 = vst [vmem:[#allocation5 + $0x328] sm:$0xff] %v972
    %1229 = vst [vmem:[#allocation5 + $0x330] sm:$0xff] %v973
    %1230 = vst [vmem:[#allocation5 + $0x338] sm:$0xff] %v974
    %1231 = vst [vmem:[#allocation5 + $0x340] sm:$0xff] %v975
    %1232 = vst [vmem:[#allocation5 + $0x348] sm:$0xff] %v976
    %1233 = vst [vmem:[#allocation5 + $0x350] sm:$0xff] %v977
    %1234 = vst [vmem:[#allocation5 + $0x358] sm:$0xff] %v978
    %1235 = vst [vmem:[#allocation5 + $0x360] sm:$0xff] %v979
    %1236 = vst [vmem:[#allocation5 + $0x368] sm:$0xff] %v980
    %1237 = vst [vmem:[#allocation5 + $0x370] sm:$0xff] %v981
    %1238 = vst [vmem:[#allocation5 + $0x378] sm:$0xff] %v982
    %1239 = vst [vmem:[#allocation5 + $0x380] sm:$0xff] %v983
    %1240 = vst [vmem:[#allocation5 + $0x388] sm:$0xff] %v984
    %1241 = vst [vmem:[#allocation5 + $0x390] sm:$0xff] %v985
    %1242 = vst [vmem:[#allocation5 + $0x398] sm:$0xff] %v986
    %1243 = vst [vmem:[#allocation5 + $0x3a0] sm:$0xff] %v987
    %1244 = vst [vmem:[#allocation5 + $0x3a8] sm:$0xff] %v988
    %1245 = vst [vmem:[#allocation5 + $0x3b0] sm:$0xff] %v989
    %1246 = vst [vmem:[#allocation5 + $0x3b8] sm:$0xff] %v990
    %1247 = vst [vmem:[#allocation5 + $0x3c0] sm:$0xff] %v991
    %1248 = vst [vmem:[#allocation5 + $0x3c8] sm:$0xff] %v992
    %1249 = vst [vmem:[#allocation5 + $0x3d0] sm:$0xff] %v993
    %1250 = vst [vmem:[#allocation5 + $0x3d8] sm:$0xff] %v994
    %1251 = vst [vmem:[#allocation5 + $0x3e0] sm:$0xff] %v995
    %1252 = vst [vmem:[#allocation5 + $0x3e8] sm:$0xff] %v996
    %1253 = vst [vmem:[#allocation5 + $0x3f0] sm:$0xff] %v997
    %1254 = vst [vmem:[#allocation5 + $0x3f8] sm:$0xff] %v998
    %1255 = vst [vmem:[#allocation5 + $0x400] sm:$0xff] %v999
    %1256 = vst [vmem:[#allocation5 + $0x408] sm:$0xff] %v1000
    %1257 = vst [vmem:[#allocation5 + $0x410] sm:$0xff] %v1001
    %1258 = vst [vmem:[#allocation5 + $0x418] sm:$0xff] %v1002
    %1259 = vst [vmem:[#allocation5 + $0x420] sm:$0xff] %v1003
    %1260 = vst [vmem:[#allocation5 + $0x428] sm:$0xff] %v1004
    %1261 = vst [vmem:[#allocation5 + $0x430] sm:$0xff] %v1005
    %1262 = vst [vmem:[#allocation5 + $0x438] sm:$0xff] %v1006
    %1263 = vst [vmem:[#allocation5 + $0x440] sm:$0xff] %v1007
    %1264 = vst [vmem:[#allocation5 + $0x448] sm:$0xff] %v1008
    %1265 = vst [vmem:[#allocation5 + $0x450] sm:$0xff] %v1009
    %1266 = vst [vmem:[#allocation5 + $0x458] sm:$0xff] %v1010
    %1267 = vst [vmem:[#allocation5 + $0x460] sm:$0xff] %v1011
    %1268 = vst [vmem:[#allocation5 + $0x468] sm:$0xff] %v1012
    %1269 = vst [vmem:[#allocation5 + $0x470] sm:$0xff] %v1013
    %1270 = vst [vmem:[#allocation5 + $0x478] sm:$0xff] %v1014
    %1271 = vst [vmem:[#allocation5 + $0x480] sm:$0xff] %v1015
    %1272 = vst [vmem:[#allocation5 + $0x488] sm:$0xff] %v1016
    %1273 = vst [vmem:[#allocation5 + $0x490] sm:$0xff] %v1017
    %1274 = vst [vmem:[#allocation5 + $0x498] sm:$0xff] %v1018
    %1275 = vst [vmem:[#allocation5 + $0x4a0] sm:$0xff] %v1019
    %1276 = vst [vmem:[#allocation5 + $0x4a8] sm:$0xff] %v1020
    %1277 = vst [vmem:[#allocation5 + $0x4b0] sm:$0xff] %v1021
    %1278 = vst [vmem:[#allocation5 + $0x4b8] sm:$0xff] %v1022
    %1279 = vst [vmem:[#allocation5 + $0x4c0] sm:$0xff] %v1023
    %1280 = vst [vmem:[#allocation5 + $0x4c8] sm:$0xff] %v1024
    %1281 = vst [vmem:[#allocation5 + $0x4d0] sm:$0xff] %v1025
    %1282 = vst [vmem:[#allocation5 + $0x4d8] sm:$0xff] %v1026
    %1283 = vst [vmem:[#allocation5 + $0x4e0] sm:$0xff] %v1027
    %1284 = vst [vmem:[#allocation5 + $0x4e8] sm:$0xff] %v1028
    %1285 = vst [vmem:[#allocation5 + $0x4f0] sm:$0xff] %v1029
    %1286 = vst [vmem:[#allocation5 + $0x4f8] sm:$0xff] %v1030
    %1287 = vst [vmem:[#allocation5 + $0x500] sm:$0xff] %v1031
    %1288 = vst [vmem:[#allocation5 + $0x508] sm:$0xff] %v1032
    %1289 = vst [vmem:[#allocation5 + $0x510] sm:$0xff] %v1033
    %1290 = vst [vmem:[#allocation5 + $0x518] sm:$0xff] %v1034
    %1291 = vst [vmem:[#allocation5 + $0x520] sm:$0xff] %v1035
    %1292 = vst [vmem:[#allocation5 + $0x528] sm:$0xff] %v1036
    %1293 = vst [vmem:[#allocation5 + $0x530] sm:$0xff] %v1037
    %1294 = vst [vmem:[#allocation5 + $0x538] sm:$0xff] %v1038
    %1295 = vst [vmem:[#allocation5 + $0x540] sm:$0xff] %v1039
    %1296 = vst [vmem:[#allocation5 + $0x548] sm:$0xff] %v1040
    %1297 = vst [vmem:[#allocation5 + $0x550] sm:$0xff] %v1041
    %1298 = vst [vmem:[#allocation5 + $0x558] sm:$0xff] %v1042
    %1299 = vst [vmem:[#allocation5 + $0x560] sm:$0xff] %v1043
    %1300 = vst [vmem:[#allocation5 + $0x568] sm:$0xff] %v1044
    %1301 = vst [vmem:[#allocation5 + $0x570] sm:$0xff] %v1045
    %1302 = vst [vmem:[#allocation5 + $0x578] sm:$0xff] %v1046
    %1303 = vst [vmem:[#allocation5 + $0x580] sm:$0xff] %v1047
    %1304 = vst [vmem:[#allocation5 + $0x588] sm:$0xff] %v1048
    %1305 = vst [vmem:[#allocation5 + $0x590] sm:$0xff] %v1049
    %1306 = vst [vmem:[#allocation5 + $0x598] sm:$0xff] %v1050
    %1307 = vst [vmem:[#allocation5 + $0x5a0] sm:$0xff] %v1051
    %1308 = vst [vmem:[#allocation5 + $0x5a8] sm:$0xff] %v1052
    %1309 = vst [vmem:[#allocation5 + $0x5b0] sm:$0xff] %v1053
    %1310 = vst [vmem:[#allocation5 + $0x5b8] sm:$0xff] %v1054
    %1311 = vst [vmem:[#allocation5 + $0x5c0] sm:$0xff] %v1055
    %1312 = vst [vmem:[#allocation5 + $0x5c8] sm:$0xff] %v1056
    %1313 = vst [vmem:[#allocation5 + $0x5d0] sm:$0xff] %v1057
    %1314 = vst [vmem:[#allocation5 + $0x5d8] sm:$0xff] %v1058
    %1315 = vst [vmem:[#allocation5 + $0x5e0] sm:$0xff] %v1059
    %1316 = vst [vmem:[#allocation5 + $0x5e8] sm:$0xff] %v1060
    %1317 = vst [vmem:[#allocation5 + $0x5f0] sm:$0xff] %v1061
    %1318 = vst [vmem:[#allocation5 + $0x5f8] sm:$0xff] %v1062
    %1319 = vst [vmem:[#allocation5 + $0x600] sm:$0xff] %v1063
    %1320 = vst [vmem:[#allocation5 + $0x608] sm:$0xff] %v1064
    %1321 = vst [vmem:[#allocation5 + $0x610] sm:$0xff] %v1065
    %1322 = vst [vmem:[#allocation5 + $0x618] sm:$0xff] %v1066
    %1323 = vst [vmem:[#allocation5 + $0x620] sm:$0xff] %v1067
    %1324 = vst [vmem:[#allocation5 + $0x628] sm:$0xff] %v1068
    %1325 = vst [vmem:[#allocation5 + $0x630] sm:$0xff] %v1069
    %1326 = vst [vmem:[#allocation5 + $0x638] sm:$0xff] %v1070
    %1327 = vst [vmem:[#allocation5 + $0x640] sm:$0xff] %v1071
    %1328 = vst [vmem:[#allocation5 + $0x648] sm:$0xff] %v1072
    %1329 = vst [vmem:[#allocation5 + $0x650] sm:$0xff] %v1073
    %1330 = vst [vmem:[#allocation5 + $0x658] sm:$0xff] %v1074
    %1331 = vst [vmem:[#allocation5 + $0x660] sm:$0xff] %v1075
    %1332 = vst [vmem:[#allocation5 + $0x668] sm:$0xff] %v1076
    %1333 = vst [vmem:[#allocation5 + $0x670] sm:$0xff] %v1077
    %1334 = vst [vmem:[#allocation5 + $0x678] sm:$0xff] %v1078
    %1335 = vst [vmem:[#allocation5 + $0x680] sm:$0xff] %v1079
    %1336 = vst [vmem:[#allocation5 + $0x688] sm:$0xff] %v1080
    %1337 = vst [vmem:[#allocation5 + $0x690] sm:$0xff] %v1081
    %1338 = vst [vmem:[#allocation5 + $0x698] sm:$0xff] %v1082
    %1339 = vst [vmem:[#allocation5 + $0x6a0] sm:$0xff] %v1083
    %1340 = vst [vmem:[#allocation5 + $0x6a8] sm:$0xff] %v1084
    %1341 = vst [vmem:[#allocation5 + $0x6b0] sm:$0xff] %v1085
    %1342 = vst [vmem:[#allocation5 + $0x6b8] sm:$0xff] %v1086
    %1343 = vst [vmem:[#allocation5 + $0x6c0] sm:$0xff] %v1087
    %1344 = vst [vmem:[#allocation5 + $0x6c8] sm:$0xff] %v1088
    %1345 = vst [vmem:[#allocation5 + $0x6d0] sm:$0xff] %v1089
    %1346 = vst [vmem:[#allocation5 + $0x6d8] sm:$0xff] %v1090
    %1347 = vst [vmem:[#allocation5 + $0x6e0] sm:$0xff] %v1091
    %1348 = vst [vmem:[#allocation5 + $0x6e8] sm:$0xff] %v1092
    %1349 = vst [vmem:[#allocation5 + $0x6f0] sm:$0xff] %v1093
    %1350 = vst [vmem:[#allocation5 + $0x6f8] sm:$0xff] %v1094
    %1351 = vst [vmem:[#allocation5 + $0x700] sm:$0xff] %v1095
    %1352 = vst [vmem:[#allocation5 + $0x708] sm:$0xff] %v1096
    %1353 = vst [vmem:[#allocation5 + $0x710] sm:$0xff] %v1097
    %1354 = vst [vmem:[#allocation5 + $0x718] sm:$0xff] %v1098
    %1355 = vst [vmem:[#allocation5 + $0x720] sm:$0xff] %v1099
    %1356 = vst [vmem:[#allocation5 + $0x728] sm:$0xff] %v1100
    %1357 = vst [vmem:[#allocation5 + $0x730] sm:$0xff] %v1101
    %1358 = vst [vmem:[#allocation5 + $0x738] sm:$0xff] %v1102
    %1359 = vst [vmem:[#allocation5 + $0x740] sm:$0xff] %v1103
    %1360 = vst [vmem:[#allocation5 + $0x748] sm:$0xff] %v1104
    %1361 = vst [vmem:[#allocation5 + $0x750] sm:$0xff] %v1105
    %1362 = vst [vmem:[#allocation5 + $0x758] sm:$0xff] %v1106
    %1363 = vst [vmem:[#allocation5 + $0x760] sm:$0xff] %v1107
    %1364 = vst [vmem:[#allocation5 + $0x768] sm:$0xff] %v1108
    %1365 = vst [vmem:[#allocation5 + $0x770] sm:$0xff] %v1109
    %1366 = vst [vmem:[#allocation5 + $0x778] sm:$0xff] %v1110
    %1367 = vst [vmem:[#allocation5 + $0x780] sm:$0xff] %v1111
    %1368 = vst [vmem:[#allocation5 + $0x788] sm:$0xff] %v1112
    %1369 = vst [vmem:[#allocation5 + $0x790] sm:$0xff] %v1113
    %1370 = vst [vmem:[#allocation5 + $0x798] sm:$0xff] %v1114
    %1371 = vst [vmem:[#allocation5 + $0x7a0] sm:$0xff] %v1115
    %1372 = vst [vmem:[#allocation5 + $0x7a8] sm:$0xff] %v1116
    %1373 = vst [vmem:[#allocation5 + $0x7b0] sm:$0xff] %v1117
    %1374 = vst [vmem:[#allocation5 + $0x7b8] sm:$0xff] %v1118
    %1375 = vst [vmem:[#allocation5 + $0x7c0] sm:$0xff] %v1119
    %1376 = vst [vmem:[#allocation5 + $0x7c8] sm:$0xff] %v1120
    %1377 = vst [vmem:[#allocation5 + $0x7d0] sm:$0xff] %v1121
    %1378 = vst [vmem:[#allocation5 + $0x7d8] sm:$0xff] %v1122
    %1379 = vst [vmem:[#allocation5 + $0x7e0] sm:$0xff] %v1123
    %1380 = vst [vmem:[#allocation5 + $0x7e8] sm:$0xff] %v1124
    %1381 = vst [vmem:[#allocation5 + $0x7f0] sm:$0xff] %v1125
    %1382 = vst [vmem:[#allocation5 + $0x7f8] sm:$0xff] %v1126
    // Predicated region
    $region18: #{se_layer.1} parent=1 // pred_check
      _
    $region19: #{se_layer.1} parent=1 // pred_check_branch
      %1384 = sbr.rel (0) target = $region21
    $region20: #{se_layer.1} parent=1 // pred_region
      %s1386 = ssub.s32 32768, 32768
      %1387 = vsyncadd [#allocation4], %s1386
      %s1388 = sshll.u32 [#allocation5], 4
      %s1389 = int_to_ptr.vmem [resolvable:$true] %s1388
      %1394 = dma.vmem_to_hbm [thread:$0]  %s1389, 32768, %s3, [#allocation4], 128, 128, 8
    $region21: #{se_layer.1} parent=1 // pred_fallthru
      _
    // Predicated region
    $region22: #{se_layer.1} parent=1 // pred_check
      _
    $region23: #{se_layer.1} parent=1 // pred_check_branch
      %1396 = sbr.rel (0) target = $region25
    $region24: #{se_layer.1} parent=1 // pred_region
      %1397 = dma.done [#allocation4], 32768
    $region25: #{se_layer.1} parent=1 // pred_fallthru
      _
    %1398 = vsyncpa [#allocation3], 1
    %1399 = vsyncpa [#allocation4], 1

</llo_original>
